<compile_context>
chip_gen: v5e
topology: v5e:2x2
jax: 0.10.0
libtpu: 0.0.40
codegen_flags: <defaults>
</compile_context>

<pallas_src>
import functools
import math

import jax
import jax.numpy as jnp
from jax import lax
from jax.experimental import pallas as pl
from jax.experimental.pallas import tpu as pltpu

LANE = 128
_BN_EPS = 1e-5


def _tpu_vmem_capacity():
    try:
        return int(pltpu.get_tpu_info().vmem_capacity_bytes)
    except Exception:
        return 128 * 1024 * 1024


_VMEM_CAP = _tpu_vmem_capacity()
# Scoped VMEM limit handed to Mosaic, and the per-grid-step working-set target
# used to pick row-band sizes.  v7x has 64 MiB physical VMEM per TC; v5e/v6e
# have 128 MiB, so be more conservative on v7x.
if _VMEM_CAP >= 96 * 1024 * 1024:
    VMEM_LIMIT = 48 * 1024 * 1024
    _STEP_BUDGET = 30 * 1024 * 1024
else:
    VMEM_LIMIT = 40 * 1024 * 1024
    _STEP_BUDGET = 24 * 1024 * 1024


def make_divisible(x, divisor):
    return int(math.ceil(x / divisor) * divisor)


def pad_to_lane(c):
    return max(LANE, ((c + LANE - 1) // LANE) * LANE)


def _pick_tile(c):
    """Channel tile: 256 (full MXU fill on v6e/v7x) when possible, else 128."""
    for t in (256, 128):
        if c % t == 0:
            return t
    return c


def _pick_band_rows(h_rows, row_w, halo_rows, n_inputs, n_taps, tci, tco):
    """Largest output-image-rows-per-band (dividing h_rows) whose per-step
    VMEM working set fits the generation-aware budget."""
    def footprint(th):
        ma = (th + halo_rows) * row_w
        mo = th * row_w
        return (2 * n_inputs * ma * tci * 2      # double-buffered bf16 acts
                + 2 * n_taps * tci * tco * 2     # double-buffered bf16 weights
                + mo * tco * 4                   # f32 accumulator scratch
                + 2 * mo * tco * 2)              # double-buffered bf16 output
    if footprint(h_rows) <= _STEP_BUDGET:
        return h_rows
    for th in range(h_rows - 1, 0, -1):
        if h_rows % th == 0 and footprint(th) <= _STEP_BUDGET:
            return th
    return 1


# ----------------------------- Pallas kernels ------------------------------

def _tap_matmul_kernel(*refs, taps, n_in):
    """Fused conv-as-sum-of-tap-matmuls kernel.

    refs = (a_0..a_{n_in-1}, w, b, o, acc)
      a_i : (1, Ma_i, TCI)  bf16 flattened (row-major) activations
      w   : (T, TCI, TCO)   bf16 per-tap weight slices
      b   : (1, TCO)        f32 bias
      o   : (1, Mo, TCO)    output tile (bf16)
      acc : (Mo, TCO)       f32 accumulator scratch, lives across the ci axis

    out[m, co] = relu(b[co] + sum_t a_{src_t}[m + off_t, :] @ w[t, :, co])

    The LHS is sliced BEFORE the matmul (bf16 operand reads, no (Ma, TCO) f32
    temporaries); the ci-reduction axis MUST stay innermost in the grid for
    the init/finalize gating below to be correct.
    """
    a_refs = refs[:n_in]
    w_ref, b_ref, o_ref, acc_ref = refs[n_in:]
    mo = o_ref.shape[1]
    k_id = pl.program_id(2)

    @pl.when(k_id == 0)
    def _init():
        acc_ref[...] = jnp.zeros_like(acc_ref)

    acc = acc_ref[...]
    for t, (src, off) in enumerate(taps):
        lhs = a_refs[src][0, pl.ds(off, mo), :]            # (Mo, TCI) bf16
        acc = acc + jnp.dot(lhs, w_ref[t],
                            preferred_element_type=jnp.float32)
    acc_ref[...] = acc

    @pl.when(k_id == pl.num_programs(2) - 1)
    def _finalize():
        y = jnp.maximum(acc + b_ref[...], 0.0)
        o_ref[0] = y.astype(o_ref.dtype)


def _sppf_pool_kernel(x_ref, y1_ref, y2_ref, y3_ref, pad_ref):
    """Three chained 5x5 / stride-1 / 'same' max pools, separable (5+5 maxes),
    computed in the activation dtype (max is exact in bf16).  Only the
    2-element -inf border frame is filled, once per grid step; the H pass
    (cheap leading-dim slices) runs before the W pass."""
    h, w = x_ref.shape[1], x_ref.shape[2]
    c = pad_ref.shape[2]
    dt = pad_ref.dtype
    pad_ref[0:2, :, :] = jnp.full((2, w + 4, c), -jnp.inf, dt)
    pad_ref[h + 2:h + 4, :, :] = jnp.full((2, w + 4, c), -jnp.inf, dt)
    pad_ref[:, 0:2, :] = jnp.full((h + 4, 2, c), -jnp.inf, dt)
    pad_ref[:, w + 2:w + 4, :] = jnp.full((h + 4, 2, c), -jnp.inf, dt)

    def pool(v):                                           # v: (h, w, C)
        pad_ref[2:2 + h, 2:2 + w, :] = v
        p = pad_ref[...]
        t = p[0:h, :, :]
        for dh in range(1, 5):                             # H pass (leading dim)
            t = jnp.maximum(t, p[dh:dh + h, :, :])
        o = t[:, 0:w, :]
        for dw in range(1, 5):                             # W pass (sublane)
            o = jnp.maximum(o, t[:, dw:dw + w, :])
        return o

    x = x_ref[0]
    y1 = pool(x)
    y1_ref[0] = y1
    y2 = pool(y1)
    y2_ref[0] = y2
    y3 = pool(y2)
    y3_ref[0] = y3


# ------------------------------ kernel wrappers -----------------------------

def fused_tap_matmul(inputs, w, b, taps, mo, out_dtype=jnp.bfloat16):
    """out[n, m, :] = relu(b + sum_t inputs[src_t][n, m+off_t, :] @ w[t])."""
    bsz = inputs[0].shape[0]
    ci = inputs[0].shape[2]
    t_cnt, ci_w, co = w.shape
    assert ci_w == ci and t_cnt == len(taps)
    tci = _pick_tile(ci)
    tco = _pick_tile(co)
    n_ci = ci // tci
    n_co = co // tco

    in_specs = [pl.BlockSpec((1, x.shape[1], tci), lambda bi, j, k: (bi, 0, k))
                for x in inputs]
    in_specs.append(pl.BlockSpec((t_cnt, tci, tco), lambda bi, j, k: (0, k, j)))
    in_specs.append(pl.BlockSpec((1, tco), lambda bi, j, k: (0, j)))

    kernel = functools.partial(_tap_matmul_kernel, taps=tuple(taps),
                               n_in=len(inputs))
    return pl.pallas_call(
        kernel,
        out_shape=jax.ShapeDtypeStruct((bsz, mo, co), out_dtype),
        grid_spec=pltpu.PrefetchScalarGridSpec(
            num_scalar_prefetch=0,
            grid=(bsz, n_co, n_ci),          # ci reduction stays innermost
            in_specs=in_specs,
            out_specs=pl.BlockSpec((1, mo, tco), lambda bi, j, k: (bi, 0, j)),
            scratch_shapes=[pltpu.VMEM((mo, tco), jnp.float32)],
        ),
        compiler_params=pltpu.CompilerParams(
            dimension_semantics=("parallel", "parallel", "arbitrary"),
            vmem_limit_bytes=VMEM_LIMIT),
    )(*inputs, w, b.reshape(1, co))


def conv3x3_s1_apply(x, w_taps, b, tile_rows=None):
    """3x3 / stride 1 / pad 1 conv + bias + ReLU.  x: (N,H,W,Cs) bf16.

    Output rows are tiled into row-bands (halo baked into the single pad /
    band build) so the per-grid-step VMEM working set stays within budget."""
    n, h, w_, c = x.shape
    co = w_taps.shape[-1]
    wp = w_ + 2
    tci, tco = _pick_tile(c), _pick_tile(co)
    th = tile_rows if tile_rows is not None else _pick_band_rows(
        h, wp, halo_rows=3, n_inputs=1, n_taps=9, tci=tci, tco=tco)
    assert h % th == 0
    nb = h // th

    # ONE pad: spatial (1,1) plus one extra bottom row that doubles as the
    # flat-offset slack (previously a second jnp.pad).
    xp = jnp.pad(x, ((0, 0), (1, 2), (1, 1), (0, 0)))       # (n, h+3, wp, c)
    if nb == 1:
        a = xp.reshape(n, (h + 3) * wp, c)
    else:
        bands = [xp[:, i * th:i * th + th + 3] for i in range(nb)]
        a = jnp.stack(bands, axis=1).reshape(n * nb, (th + 3) * wp, c)

    mo = th * wp                           # 2 wrap columns per row, sliced off
    offsets = [kh * wp + kw for kh in range(3) for kw in range(3)]
    y = fused_tap_matmul([a], w_taps, b, [(0, o) for o in offsets], mo)
    return y.reshape(n, h, wp, co)[:, :, :w_, :]


def conv3x3_s2_apply(x, w_taps, b, tile_rows=None):
    """3x3 / stride 2 / pad 1 conv + bias + ReLU via space-to-depth.
    x: (N,H,W,Cs) bf16 (H, W even); w_taps: (4, 4*Cs, Co)."""
    n, h, w_, c = x.shape
    assert h % 2 == 0 and w_ % 2 == 0
    ho, wo = h // 2, w_ // 2
    ws = wo + 1
    co = w_taps.shape[-1]
    tci, tco = _pick_tile(4 * c), _pick_tile(co)
    th = tile_rows if tile_rows is not None else _pick_band_rows(
        ho, ws, halo_rows=2, n_inputs=1, n_taps=4, tci=tci, tco=tco)
    assert ho % th == 0
    nb = ho // th

    xp = jnp.pad(x, ((0, 0), (1, 3), (1, 1), (0, 0)))       # (n, h+4, wp, c)
    hs = (h + 4) // 2                                        # = ho + 2
    xs = jnp.transpose(xp.reshape(n, hs, 2, ws, 2, c), (0, 1, 3, 2, 4, 5))
    xs = xs.reshape(n, hs, ws, 4 * c)
    if nb == 1:
        a = xs.reshape(n, hs * ws, 4 * c)
    else:
        bands = [xs[:, i * th:i * th + th + 2] for i in range(nb)]
        a = jnp.stack(bands, axis=1).reshape(n * nb, (th + 2) * ws, 4 * c)

    mo = th * ws
    offsets = [dh * ws + dw for dh in range(2) for dw in range(2)]
    y = fused_tap_matmul([a], w_taps, b, [(0, o) for o in offsets], mo)
    return y.reshape(n, ho, ws, co)[:, :, :wo, :]


def sppf_pools(x):
    """Returns (pool(x), pool^2(x), pool^3(x)) for the 5x5 'same' max pool."""
    n, h, w_, c = x.shape
    tci = _pick_tile(c)
    n_ci = c // tci
    spec = pl.BlockSpec((1, h, w_, tci), lambda bi, k: (bi, 0, 0, k))
    y1, y2, y3 = pl.pallas_call(
        _sppf_pool_kernel,
        out_shape=[jax.ShapeDtypeStruct((n, h, w_, c), x.dtype)] * 3,
        grid_spec=pltpu.PrefetchScalarGridSpec(
            num_scalar_prefetch=0,
            grid=(n, n_ci),
            in_specs=[spec],
            out_specs=[spec] * 3,
            scratch_shapes=[pltpu.VMEM((h + 4, w_ + 4, tci), x.dtype)],
        ),
        compiler_params=pltpu.CompilerParams(
            dimension_semantics=("parallel", "parallel"),
            vmem_limit_bytes=VMEM_LIMIT),
    )(x)
    return y1, y2, y3


def sppf_apply(bp, x):
    n, h, w_, c = x.shape
    hw = h * w_
    xf = x.reshape(n, hw, c)
    x1 = fused_tap_matmul([xf], bp['w1'], bp['b1'], [(0, 0)], hw)      # cv1
    c1 = bp['w1'].shape[-1]
    y1, y2, y3 = sppf_pools(x1.reshape(n, h, w_, c1))
    flats = [x1, y1.reshape(n, hw, c1), y2.reshape(n, hw, c1),
             y3.reshape(n, hw, c1)]
    out = fused_tap_matmul(flats, bp['w2'], bp['b2'],
                           [(0, 0), (1, 0), (2, 0), (3, 0)], hw)       # cv2
    return out.reshape(n, h, w_, bp['w2'].shape[-1])


# ------------------- parameters / one-time weight preparation ---------------

def _bn_params(key, c):
    k1, k2, k3, k4 = jax.random.split(key, 4)
    gamma = jax.random.uniform(k1, (c,), minval=0.5, maxval=1.5)
    beta = 0.1 * jax.random.normal(k2, (c,))
    mean = 0.1 * jax.random.normal(k3, (c,))
    var = jax.random.uniform(k4, (c,), minval=0.5, maxval=1.5)
    return (gamma, beta, mean, var)


def _fuse_conv_bn(W, bn):
    gamma, beta, mean, var = bn
    t = gamma / jnp.sqrt(var + _BN_EPS)
    return W * t[:, None, None, None], beta - mean * t


def repvgg_equivalent_kernel_bias(p):
    """RepVGG get_equivalent_kernel_bias(): 3x3 + padded 1x1 + identity."""
    k3, b3 = _fuse_conv_bn(p['w3'], p['bn3'])
    k1, b1 = _fuse_conv_bn(p['w1'], p['bn1'])
    K = k3 + jnp.pad(k1, ((0, 0), (0, 0), (1, 1), (1, 1)))
    B = b3 + b1
    if 'bnid' in p:
        cin = p['cin']
        idk = jnp.zeros((cin, cin, 3, 3), jnp.float32)
        idk = idk.at[jnp.arange(cin), jnp.arange(cin), 1, 1].set(1.0)
        kid, bid = _fuse_conv_bn(idk, p['bnid'])
        K = K + kid
        B = B + bid
    return K, B


def pack_weight_s1(K, cin_store, cout_pad):
    """OIHW kernel -> (KH*KW, cin_store, cout_pad) tap matrices (f32)."""
    co, ci, kh, kw = K.shape
    kt = jnp.transpose(K, (2, 3, 1, 0)).reshape(kh * kw, ci, co)
    w = jnp.zeros((kh * kw, cin_store, cout_pad), jnp.float32)
    return w.at[:, :ci, :co].set(kt)


def pack_weight_s2(K, cin_store, cout_pad):
    """OIHW 3x3 kernel -> space-to-depth taps (4, 4*cin_store, cout_pad) (f32).
    s2d channel order: channel = (row_parity*2 + col_parity)*cin_store + ci."""
    co, ci, _, _ = K.shape
    w = jnp.zeros((4, 4 * cin_store, cout_pad), jnp.float32)
    for dh in range(2):
        for dw in range(2):
            tap = dh * 2 + dw
            for a in range(2):
                for b2 in range(2):
                    kh_, kw_ = 2 * dh + a, 2 * dw + b2
                    if kh_ < 3 and kw_ < 3:
                        phase = a * 2 + b2
                        blk = jnp.transpose(K[:, :, kh_, kw_], (1, 0))
                        w = w.at[tap, phase * cin_store:phase * cin_store + ci,
                                 :co].set(blk)
    return w


def pack_bias(B, cout_pad):
    return jnp.zeros((cout_pad,), jnp.float32).at[:B.shape[0]].set(
        B.astype(jnp.float32))


def init_repvgg_block(key, cin, cout, stride):
    kd, kbd, k1, kb1, kid = jax.random.split(key, 5)
    p = {
        'w3': 0.05 * jax.random.normal(kd, (cout, cin, 3, 3)),
        'bn3': _bn_params(kbd, cout),
        'w1': 0.05 * jax.random.normal(k1, (cout, cin, 1, 1)),
        'bn1': _bn_params(kb1, cout),
        'cin': cin, 'cout': cout, 'stride': stride,
    }
    if cin == cout and stride == 1:
        p['bnid'] = _bn_params(kid, cin)
    return p


def init_sppf(key, cin, cout):
    c_ = cin // 2
    k1, kb1, k2, kb2 = jax.random.split(key, 4)
    return {
        'w1': 0.05 * jax.random.normal(k1, (c_, cin, 1, 1)),
        'bn1': _bn_params(kb1, c_),
        'w2': 0.05 * jax.random.normal(k2, (cout, c_ * 4, 1, 1)),
        'bn2': _bn_params(kb2, cout),
        'cin': cin, 'cout': cout,
    }


def init_repvgg_yolox(key, in_channels=3, depth=1.0, width=1.0):
    num_repeat_backbone = [1, 6, 12, 18, 6]
    channels_list_backbone = [64, 128, 256, 512, 1024]
    num_repeat_neck = [12, 12, 12, 12]
    channels_list_neck = [256, 128, 128, 256, 256, 512]
    num_repeats = [max(round(i * depth), 1) if i > 1 else i
                   for i in num_repeat_backbone + num_repeat_neck]
    channels_list = [make_divisible(i * width, 8)
                     for i in channels_list_backbone + channels_list_neck]
    keys = iter(jax.random.split(key, 128))

    def make_stage(cin, cout, repeat, add_ppf=False):
        blocks = [init_repvgg_block(next(keys), cin, cout, 2)]
        for _ in range(repeat):
            blocks.append(init_repvgg_block(next(keys), cout, cout, 1))
        if add_ppf:
            blocks.append(('sppf', init_sppf(next(keys), cout, cout)))
        return blocks

    return {
        'stage0': [init_repvgg_block(next(keys), in_channels, channels_list[0], 2)],
        'stage1': make_stage(channels_list[0], channels_list[1], num_repeats[1]),
        'stage2': make_stage(channels_list[1], channels_list[2], num_repeats[2]),
        'stage3': make_stage(channels_list[2], channels_list[3], num_repeats[3]),
        'stage4': make_stage(channels_list[3], channels_list[4], num_repeats[4],
                             add_ppf=True),
        'in_channels': in_channels,
        'channels': channels_list[:5],
    }


def prepare_deploy(params):
    """One-time: fold BN, reparameterize, pack + bf16-cast weights for the
    channel-padded NHWC Pallas kernels (hoisted out of the forward path)."""
    cur_store = params['in_channels']        # channels of the stored activation
    stages = []
    for sname in ('stage0', 'stage1', 'stage2', 'stage3', 'stage4'):
        blocks = []
        for blk in params[sname]:
            if isinstance(blk, tuple) and blk[0] == 'sppf':
                p = blk[1]
                cin, cout = p['cin'], p['cout']
                c_ = cin // 2
                c_pad, cout_pad = pad_to_lane(c_), pad_to_lane(cout)
                k1, b1 = _fuse_conv_bn(p['w1'], p['bn1'])
                k2, b2 = _fuse_conv_bn(p['w2'], p['bn2'])
                w1 = pack_weight_s1(k1, cur_store, c_pad)
                w2 = jnp.zeros((4, c_pad, cout_pad), jnp.float32)
                for t in range(4):
                    sl = k2[:, t * c_:(t + 1) * c_, 0, 0]          # (cout, c_)
                    w2 = w2.at[t, :c_, :cout].set(jnp.transpose(sl, (1, 0)))
                blocks.append({'kind': 'sppf',
                               'w1': w1.astype(jnp.bfloat16),
                               'b1': pack_bias(b1, c_pad),
                               'w2': w2.astype(jnp.bfloat16),
                               'b2': pack_bias(b2, cout_pad)})
                cur_store = cout_pad
            else:
                K, B = repvgg_equivalent_kernel_bias(blk)
                cout_pad = pad_to_lane(blk['cout'])
                if blk['stride'] == 2:
                    w = pack_weight_s2(K, cur_store, cout_pad)
                else:
                    w = pack_weight_s1(K, cur_store, cout_pad)
                blocks.append({'kind': 'rep', 'stride': blk['stride'],
                               'w': w.astype(jnp.bfloat16),
                               'b': pack_bias(B, cout_pad)})
                cur_store = cout_pad
        stages.append(blocks)
    return {'stages': stages, 'real_out': params['channels']}


# ------------------------------ RepVGGYOLOX ---------------------------------

def repvgg_yolox_forward(deploy, x_nchw):
    x = jnp.transpose(x_nchw, (0, 2, 3, 1)).astype(jnp.bfloat16)   # NCHW->NHWC
    feats = []
    for si, blocks in enumerate(deploy['stages']):
        for bp in blocks:
            if bp['kind'] == 'rep':
                if bp['stride'] == 2:
                    x = conv3x3_s2_apply(x, bp['w'], bp['b'])
                else:
                    x = conv3x3_s1_apply(x, bp['w'], bp['b'])
            else:
                x = sppf_apply(bp, x)
        if si >= 2:
            feats.append(x)
    outs = []
    for f, c_real in zip(feats, deploy['real_out'][2:]):
        o = f[..., :c_real].astype(jnp.float32)
        outs.append(jnp.transpose(o, (0, 3, 1, 2)))                # NHWC->NCHW
    return tuple(outs)


# ------------------------------- self test ----------------------------------

def _self_test():
    """Check the conv/pool Pallas kernels against XLA references, including
    the M-row-banded and 256-wide-channel-tile paths."""
    key = jax.random.PRNGKey(123)
    kx, kw, kb = jax.random.split(key, 3)
    n, h, w_, c, co = 2, 8, 8, 128, 128
    x = jax.random.normal(kx, (n, h, w_, c), jnp.float32).astype(jnp.bfloat16)
    K = (0.05 * jax.random.normal(kw, (co, c, 3, 3))
         ).astype(jnp.bfloat16).astype(jnp.float32)
    b = (0.1 * jax.random.normal(kb, (co,))).astype(jnp.float32)

    def ref_conv(xa, Ka, ba, stride):
        y = lax.conv_general_dilated(
            xa.astype(jnp.float32), jnp.transpose(Ka, (2, 3, 1, 0)),
            (stride, stride), ((1, 1), (1, 1)),
            dimension_numbers=('NHWC', 'HWIO', 'NHWC'),
            precision=lax.Precision.HIGHEST)
        return jnp.maximum(y + ba, 0.0)

    w_s1 = pack_weight_s1(K, c, co).astype(jnp.bfloat16)
    w_s2 = pack_weight_s2(K, c, co).astype(jnp.bfloat16)
    r1 = ref_conv(x, K, b, 1)
    r2 = ref_conv(x, K, b, 2)

    y = conv3x3_s1_apply(x, w_s1, b).astype(jnp.float32)
    assert jnp.allclose(y, r1, rtol=2e-2, atol=2e-2), "s1 mismatch"
    y = conv3x3_s1_apply(x, w_s1, b, tile_rows=2).astype(jnp.float32)
    assert jnp.allclose(y, r1, rtol=2e-2, atol=2e-2), "s1 banded mismatch"

    y = conv3x3_s2_apply(x, w_s2, b).astype(jnp.float32)
    assert jnp.allclose(y, r2, rtol=2e-2, atol=2e-2), "s2 mismatch"
    y = conv3x3_s2_apply(x, w_s2, b, tile_rows=2).astype(jnp.float32)
    assert jnp.allclose(y, r2, rtol=2e-2, atol=2e-2), "s2 banded mismatch"

    # 256-wide channel tiles (v6e/v7x MXU fill path).
    c2 = 256
    x2 = jax.random.normal(kx, (1, 8, 8, c2), jnp.float32).astype(jnp.bfloat16)
    K2 = (0.05 * jax.random.normal(kw, (c2, c2, 3, 3))
          ).astype(jnp.bfloat16).astype(jnp.float32)
    b2 = (0.1 * jax.random.normal(kb, (c2,))).astype(jnp.float32)
    y = conv3x3_s1_apply(x2, pack_weight_s1(K2, c2, c2).astype(jnp.bfloat16),
                         b2).astype(jnp.float32)
    assert jnp.allclose(y, ref_conv(x2, K2, b2, 1), rtol=2e-2, atol=2e-2), \
        "256-tile mismatch"

    # SPPF pooling (bf16 compute, -inf border frame only).
    xp_ = jnp.abs(x)[:, :6, :6, :]

    def ref_pool(v):
        return lax.reduce_window(v, -jnp.inf, lax.max, (1, 5, 5, 1),
                                 (1, 1, 1, 1),
                                 [(0, 0), (2, 2), (2, 2), (0, 0)])

    y1, y2, y3 = sppf_pools(xp_)
    rp1 = ref_pool(xp_.astype(jnp.float32))
    rp2 = ref_pool(rp1)
    rp3 = ref_pool(rp2)
    for got, ref in ((y1, rp1), (y2, rp2), (y3, rp3)):
        assert jnp.allclose(got.astype(jnp.float32), ref, atol=1e-6), "pool"


if __name__ == "__main__":
    _self_test()

    key = jax.random.PRNGKey(0)
    kp, kx = jax.random.split(key)

    # Small config: width=0.125 -> channels [8,16,32,64,128]; depth=1/18 ->
    # one extra RepVGG block per stage.  Input (2, 3, 64, 64) NCHW.
    params = init_repvgg_yolox(kp, in_channels=3, depth=1.0 / 18.0, width=0.125)
    deploy = prepare_deploy(params)          # one-time BN fold / repack (bf16)

    x = jax.random.normal(kx, (2, 3, 64, 64), dtype=jnp.float32)
    fwd = jax.jit(functools.partial(repvgg_yolox_forward, deploy))
    outs = jax.block_until_ready(fwd(x))

    assert outs[0].shape == (2, 32, 8, 8), outs[0].shape
    assert outs[1].shape == (2, 64, 4, 4), outs[1].shape
    assert outs[2].shape == (2, 128, 2, 2), outs[2].shape
    assert all(bool(jnp.all(jnp.isfinite(o))) for o in outs)

    print("KERNEL_OK")
</pallas_src>

<mosaic_0001>
module attributes {stable_mosaic.version = 11 : i64} {
  func.func @_tap_matmul_kernel(%arg0: i32, %arg1: i32, %arg2: i32, %arg3: memref<1x110x128xbf16, #tpu.memory_space<vmem>>, %arg4: memref<9x128x128xbf16, #tpu.memory_space<vmem>>, %arg5: memref<1x128xf32, #tpu.memory_space<vmem>>, %arg6: memref<1x80x128xbf16, #tpu.memory_space<vmem>>, %arg7: memref<80x128xf32, #tpu.memory_space<vmem>>) attributes {dimension_semantics = [#tpu.dimension_semantics<parallel>, #tpu.dimension_semantics<parallel>, #tpu.dimension_semantics<arbitrary>], iteration_bounds = array<i64: 2, 1, 1>, scalar_prefetch = 0 : i64, scratch_operands = 1 : i64, tpu.core_type = #tpu.core_type<tc>, window_params = [{transform_indices = @transform_0, window_bounds = array<i64: 1, 110, 128>}, {transform_indices = @transform_1, window_bounds = array<i64: 9, 128, 128>}, {transform_indices = @transform_2, window_bounds = array<i64: 1, 128>}, {transform_indices = @transform_3, window_bounds = array<i64: 1, 80, 128>}]} {
    %c0_i32 = arith.constant 0 : i32
    %0 = arith.cmpi eq, %arg2, %c0_i32 : i32
    %1 = arith.extui %0 : i1 to i32
    %c0_i32_0 = arith.constant 0 : i32
    %2 = arith.cmpi ne, %1, %c0_i32_0 : i32
    scf.if %2 {
      %cst_54 = arith.constant 0.000000e+00 : f32
      %62 = vector.broadcast %cst_54 : f32 to vector<80x128xf32>
      %c0_55 = arith.constant 0 : index
      %c0_56 = arith.constant 0 : index
      %63 = vector.load %arg7[%c0_55, %c0_56] : memref<80x128xf32, #tpu.memory_space<vmem>>, vector<80x128xf32>
      tpu.vector_store %arg7[%c0_55, %c0_56], %62 {strides = array<i32>} : memref<80x128xf32, #tpu.memory_space<vmem>>, vector<80x128xf32>,
    } else {
    }
    %c0 = arith.constant 0 : index
    %c0_1 = arith.constant 0 : index
    %3 = vector.load %arg7[%c0, %c0_1] : memref<80x128xf32, #tpu.memory_space<vmem>>, vector<80x128xf32>
    %c0_2 = arith.constant 0 : index
    %c0_3 = arith.constant 0 : index
    %c0_4 = arith.constant 0 : index
    %4 = vector.load %arg3[%c0_2, %c0_3, %c0_4] : memref<1x110x128xbf16, #tpu.memory_space<vmem>>, vector<1x80x128xbf16>
    %5 = vector.shape_cast %4 : vector<1x80x128xbf16> to vector<80x128xbf16>
    %c0_5 = arith.constant 0 : index
    %c0_6 = arith.constant 0 : index
    %c0_7 = arith.constant 0 : index
    %6 = vector.load %arg4[%c0_5, %c0_6, %c0_7] : memref<9x128x128xbf16, #tpu.memory_space<vmem>>, vector<1x128x128xbf16>
    %7 = vector.shape_cast %6 : vector<1x128x128xbf16> to vector<128x128xbf16>
    %cst = arith.constant dense<0.000000e+00> : vector<80x128xf32>
    %8 = tpu.matmul %5, %7, %cst {dimension_numbers = #tpu.dot_dimension_numbers<[1], [0], [0], [1], [0, 0, 1, 1], [], []>} : vector<80x128xbf16>, vector<128x128xbf16>, vector<80x128xf32> -> vector<80x128xf32>
    %9 = arith.addf %3, %8 : vector<80x128xf32>
    %c0_8 = arith.constant 0 : index
    %c1 = arith.constant 1 : index
    %c0_9 = arith.constant 0 : index
    %10 = vector.load %arg3[%c0_8, %c1, %c0_9] : memref<1x110x128xbf16, #tpu.memory_space<vmem>>, vector<1x80x128xbf16>
    %11 = vector.shape_cast %10 : vector<1x80x128xbf16> to vector<80x128xbf16>
    %c1_10 = arith.constant 1 : index
    %c0_11 = arith.constant 0 : index
    %c0_12 = arith.constant 0 : index
    %12 = vector.load %arg4[%c1_10, %c0_11, %c0_12] : memref<9x128x128xbf16, #tpu.memory_space<vmem>>, vector<1x128x128xbf16>
    %13 = vector.shape_cast %12 : vector<1x128x128xbf16> to vector<128x128xbf16>
    %cst_13 = arith.constant dense<0.000000e+00> : vector<80x128xf32>
    %14 = tpu.matmul %11, %13, %cst_13 {dimension_numbers = #tpu.dot_dimension_numbers<[1], [0], [0], [1], [0, 0, 1, 1], [], []>} : vector<80x128xbf16>, vector<128x128xbf16>, vector<80x128xf32> -> vector<80x128xf32>
    %15 = arith.addf %9, %14 : vector<80x128xf32>
    %c0_14 = arith.constant 0 : index
    %c2 = arith.constant 2 : index
    %c0_15 = arith.constant 0 : index
    %16 = vector.load %arg3[%c0_14, %c2, %c0_15] : memref<1x110x128xbf16, #tpu.memory_space<vmem>>, vector<1x80x128xbf16>
    %17 = vector.shape_cast %16 : vector<1x80x128xbf16> to vector<80x128xbf16>
    %c2_16 = arith.constant 2 : index
    %c0_17 = arith.constant 0 : index
    %c0_18 = arith.constant 0 : index
    %18 = vector.load %arg4[%c2_16, %c0_17, %c0_18] : memref<9x128x128xbf16, #tpu.memory_space<vmem>>, vector<1x128x128xbf16>
    %19 = vector.shape_cast %18 : vector<1x128x128xbf16> to vector<128x128xbf16>
    %cst_19 = arith.constant dense<0.000000e+00> : vector<80x128xf32>
    %20 = tpu.matmul %17, %19, %cst_19 {dimension_numbers = #tpu.dot_dimension_numbers<[1], [0], [0], [1], [0, 0, 1, 1], [], []>} : vector<80x128xbf16>, vector<128x128xbf16>, vector<80x128xf32> -> vector<80x128xf32>
    %21 = arith.addf %15, %20 : vector<80x128xf32>
    %c0_20 = arith.constant 0 : index
    %c10 = arith.constant 10 : index
    %c0_21 = arith.constant 0 : index
    %22 = vector.load %arg3[%c0_20, %c10, %c0_21] : memref<1x110x128xbf16, #tpu.memory_space<vmem>>, vector<1x80x128xbf16>
    %23 = vector.shape_cast %22 : vector<1x80x128xbf16> to vector<80x128xbf16>
    %c3 = arith.constant 3 : index
    %c0_22 = arith.constant 0 : index
    %c0_23 = arith.constant 0 : index
    %24 = vector.load %arg4[%c3, %c0_22, %c0_23] : memref<9x128x128xbf16, #tpu.memory_space<vmem>>, vector<1x128x128xbf16>
    %25 = vector.shape_cast %24 : vector<1x128x128xbf16> to vector<128x128xbf16>
    %cst_24 = arith.constant dense<0.000000e+00> : vector<80x128xf32>
    %26 = tpu.matmul %23, %25, %cst_24 {dimension_numbers = #tpu.dot_dimension_numbers<[1], [0], [0], [1], [0, 0, 1, 1], [], []>} : vector<80x128xbf16>, vector<128x128xbf16>, vector<80x128xf32> -> vector<80x128xf32>
    %27 = arith.addf %21, %26 : vector<80x128xf32>
    %c0_25 = arith.constant 0 : index
    %c11 = arith.constant 11 : index
    %c0_26 = arith.constant 0 : index
    %28 = vector.load %arg3[%c0_25, %c11, %c0_26] : memref<1x110x128xbf16, #tpu.memory_space<vmem>>, vector<1x80x128xbf16>
    %29 = vector.shape_cast %28 : vector<1x80x128xbf16> to vector<80x128xbf16>
    %c4 = arith.constant 4 : index
    %c0_27 = arith.constant 0 : index
    %c0_28 = arith.constant 0 : index
    %30 = vector.load %arg4[%c4, %c0_27, %c0_28] : memref<9x128x128xbf16, #tpu.memory_space<vmem>>, vector<1x128x128xbf16>
    %31 = vector.shape_cast %30 : vector<1x128x128xbf16> to vector<128x128xbf16>
    %cst_29 = arith.constant dense<0.000000e+00> : vector<80x128xf32>
    %32 = tpu.matmul %29, %31, %cst_29 {dimension_numbers = #tpu.dot_dimension_numbers<[1], [0], [0], [1], [0, 0, 1, 1], [], []>} : vector<80x128xbf16>, vector<128x128xbf16>, vector<80x128xf32> -> vector<80x128xf32>
    %33 = arith.addf %27, %32 : vector<80x128xf32>
    %c0_30 = arith.constant 0 : index
    %c12 = arith.constant 12 : index
    %c0_31 = arith.constant 0 : index
    %34 = vector.load %arg3[%c0_30, %c12, %c0_31] : memref<1x110x128xbf16, #tpu.memory_space<vmem>>, vector<1x80x128xbf16>
    %35 = vector.shape_cast %34 : vector<1x80x128xbf16> to vector<80x128xbf16>
    %c5 = arith.constant 5 : index
    %c0_32 = arith.constant 0 : index
    %c0_33 = arith.constant 0 : index
    %36 = vector.load %arg4[%c5, %c0_32, %c0_33] : memref<9x128x128xbf16, #tpu.memory_space<vmem>>, vector<1x128x128xbf16>
    %37 = vector.shape_cast %36 : vector<1x128x128xbf16> to vector<128x128xbf16>
    %cst_34 = arith.constant dense<0.000000e+00> : vector<80x128xf32>
    %38 = tpu.matmul %35, %37, %cst_34 {dimension_numbers = #tpu.dot_dimension_numbers<[1], [0], [0], [1], [0, 0, 1, 1], [], []>} : vector<80x128xbf16>, vector<128x128xbf16>, vector<80x128xf32> -> vector<80x128xf32>
    %39 = arith.addf %33, %38 : vector<80x128xf32>
    %c0_35 = arith.constant 0 : index
    %c20 = arith.constant 20 : index
    %c0_36 = arith.constant 0 : index
    %40 = vector.load %arg3[%c0_35, %c20, %c0_36] : memref<1x110x128xbf16, #tpu.memory_space<vmem>>, vector<1x80x128xbf16>
    %41 = vector.shape_cast %40 : vector<1x80x128xbf16> to vector<80x128xbf16>
    %c6 = arith.constant 6 : index
    %c0_37 = arith.constant 0 : index
    %c0_38 = arith.constant 0 : index
    %42 = vector.load %arg4[%c6, %c0_37, %c0_38] : memref<9x128x128xbf16, #tpu.memory_space<vmem>>, vector<1x128x128xbf16>
    %43 = vector.shape_cast %42 : vector<1x128x128xbf16> to vector<128x128xbf16>
    %cst_39 = arith.constant dense<0.000000e+00> : vector<80x128xf32>
    %44 = tpu.matmul %41, %43, %cst_39 {dimension_numbers = #tpu.dot_dimension_numbers<[1], [0], [0], [1], [0, 0, 1, 1], [], []>} : vector<80x128xbf16>, vector<128x128xbf16>, vector<80x128xf32> -> vector<80x128xf32>
    %45 = arith.addf %39, %44 : vector<80x128xf32>
    %c0_40 = arith.constant 0 : index
    %c21 = arith.constant 21 : index
    %c0_41 = arith.constant 0 : index
    %46 = vector.load %arg3[%c0_40, %c21, %c0_41] : memref<1x110x128xbf16, #tpu.memory_space<vmem>>, vector<1x80x128xbf16>
    %47 = vector.shape_cast %46 : vector<1x80x128xbf16> to vector<80x128xbf16>
    %c7 = arith.constant 7 : index
    %c0_42 = arith.constant 0 : index
    %c0_43 = arith.constant 0 : index
    %48 = vector.load %arg4[%c7, %c0_42, %c0_43] : memref<9x128x128xbf16, #tpu.memory_space<vmem>>, vector<1x128x128xbf16>
    %49 = vector.shape_cast %48 : vector<1x128x128xbf16> to vector<128x128xbf16>
    %cst_44 = arith.constant dense<0.000000e+00> : vector<80x128xf32>
    %50 = tpu.matmul %47, %49, %cst_44 {dimension_numbers = #tpu.dot_dimension_numbers<[1], [0], [0], [1], [0, 0, 1, 1], [], []>} : vector<80x128xbf16>, vector<128x128xbf16>, vector<80x128xf32> -> vector<80x128xf32>
    %51 = arith.addf %45, %50 : vector<80x128xf32>
    %c0_45 = arith.constant 0 : index
    %c22 = arith.constant 22 : index
    %c0_46 = arith.constant 0 : index
    %52 = vector.load %arg3[%c0_45, %c22, %c0_46] : memref<1x110x128xbf16, #tpu.memory_space<vmem>>, vector<1x80x128xbf16>
    %53 = vector.shape_cast %52 : vector<1x80x128xbf16> to vector<80x128xbf16>
    %c8 = arith.constant 8 : index
    %c0_47 = arith.constant 0 : index
    %c0_48 = arith.constant 0 : index
    %54 = vector.load %arg4[%c8, %c0_47, %c0_48] : memref<9x128x128xbf16, #tpu.memory_space<vmem>>, vector<1x128x128xbf16>
    %55 = vector.shape_cast %54 : vector<1x128x128xbf16> to vector<128x128xbf16>
    %cst_49 = arith.constant dense<0.000000e+00> : vector<80x128xf32>
    %56 = tpu.matmul %53, %55, %cst_49 {dimension_numbers = #tpu.dot_dimension_numbers<[1], [0], [0], [1], [0, 0, 1, 1], [], []>} : vector<80x128xbf16>, vector<128x128xbf16>, vector<80x128xf32> -> vector<80x128xf32>
    %57 = arith.addf %51, %56 : vector<80x128xf32>
    %c0_50 = arith.constant 0 : index
    %c0_51 = arith.constant 0 : index
    %58 = vector.load %arg7[%c0_50, %c0_51] : memref<80x128xf32, #tpu.memory_space<vmem>>, vector<80x128xf32>
    tpu.vector_store %arg7[%c0_50, %c0_51], %57 {strides = array<i32>} : memref<80x128xf32, #tpu.memory_space<vmem>>, vector<80x128xf32>,
    %c0_i32_52 = arith.constant 0 : i32
    %59 = arith.cmpi eq, %arg2, %c0_i32_52 : i32
    %60 = arith.extui %59 : i1 to i32
    %c0_i32_53 = arith.constant 0 : i32
    %61 = arith.cmpi ne, %60, %c0_i32_53 : i32
    scf.if %61 {
      %c0_54 = arith.constant 0 : index
      %c0_55 = arith.constant 0 : index
      %62 = vector.load %arg5[%c0_54, %c0_55] : memref<1x128xf32, #tpu.memory_space<vmem>>, vector<1x128xf32>
      %63 = vector.broadcast %62 : vector<1x128xf32> to vector<80x128xf32>
      %64 = arith.addf %57, %63 : vector<80x128xf32>
      %cst_56 = arith.constant 0.000000e+00 : f32
      %65 = vector.broadcast %cst_56 : f32 to vector<80x128xf32>
      %66 = arith.maximumf %64, %65 : vector<80x128xf32>
      %67 = arith.truncf %66 : vector<80x128xf32> to vector<80x128xbf16>
      %c0_57 = arith.constant 0 : index
      %c0_58 = arith.constant 0 : index
      %c0_59 = arith.constant 0 : index
      %68 = vector.load %arg6[%c0_57, %c0_58, %c0_59] : memref<1x80x128xbf16, #tpu.memory_space<vmem>>, vector<1x80x128xbf16>
      %69 = vector.shape_cast %68 : vector<1x80x128xbf16> to vector<80x128xbf16>
      %70 = vector.shape_cast %67 : vector<80x128xbf16> to vector<1x80x128xbf16>
      tpu.vector_store %arg6[%c0_57, %c0_58, %c0_59], %70 {strides = array<i32>} : memref<1x80x128xbf16, #tpu.memory_space<vmem>>, vector<1x80x128xbf16>,
    } else {
    }
    return
  }
  func.func @transform_0(%arg0: i32, %arg1: i32, %arg2: i32) -> (i32, i32, i32) {
    %c0_i32 = arith.constant 0 : i32
    %c0_i32_0 = arith.constant 0 : i32
    return %arg0, %c0_i32, %arg2 : i32, i32, i32
  }
  func.func @transform_1(%arg0: i32, %arg1: i32, %arg2: i32) -> (i32, i32, i32) {
    %c0_i32 = arith.constant 0 : i32
    %c0_i32_0 = arith.constant 0 : i32
    return %c0_i32, %arg2, %arg1 : i32, i32, i32
  }
  func.func @transform_2(%arg0: i32, %arg1: i32, %arg2: i32) -> (i32, i32) {
    %c0_i32 = arith.constant 0 : i32
    %c0_i32_0 = arith.constant 0 : i32
    return %c0_i32, %arg1 : i32, i32
  }
  func.func @transform_3(%arg0: i32, %arg1: i32, %arg2: i32) -> (i32, i32, i32) {
    %c0_i32 = arith.constant 0 : i32
    %c0_i32_0 = arith.constant 0 : i32
    return %arg0, %c0_i32, %arg1 : i32, i32, i32
  }
}

</mosaic_0001>

<llo_original>
// kernel: tpu_custom_call.1
$region0: #{tpu_custom_call.1}
  #allocation0 [shape = 'u32[]', space=smem, size = 0x4, offset = 0x4, fixed_abs, tag = 'smem constant byte address 0x4 - core index']
  #allocation1 [shape = 'u32[72,128]{1,0:T(1,128)}', space=vmem, size = 0x9000, scoped, tag = 'internal scratch']
  #allocation2 [shape = 'f32[80,128]{1,0:T(8,128)}', space=vmem, size = 0xa000, scoped, tag = 'scratch operand']
  %s0 = inlined_call_operand.vmem [shape: bf16[2,110,128], index: 0, kind: input, shape index: {}]
  %s1 = inlined_call_operand.hbm [shape: bf16[9,128,128], index: 1, kind: input, shape index: {}]
  %s2 = inlined_call_operand.vmem [shape: f32[1,128], index: 2, kind: input, shape index: {}]
  %s3 = inlined_call_operand.hbm [shape: bf16[2,80,128], index: 3, kind: output, shape index: {}]
  %s4 = sld [smem:[#allocation0]]
  $region57: #{tpu_custom_call.1} parent=0
    _
  %s6 = ssub.s32 1, %s4
  %s7 = scalar_select 0, %s6, %s4
  $region1: #{tpu_custom_call.1} parent=0
    #allocation3 [shape = 'u8[294912]{0}', space=vmem, size = 0x48000, scoped, tag = 'input window, operand 1, single buffered']
    #allocation4 [shape = 's32[2]{0}', space=sflag, size = 0x8, scoped, tag = 'scoped memory for tpu_custom_call.1']
    #allocation5 [shape = 's32[2]{0}', space=sflag, size = 0x8, scoped, tag = 'scoped memory for tpu_custom_call.1']
    #allocation6 [shape = 'u8[40960]{0}', space=vmem, size = 0xa000, scoped, tag = 'output window, operand 0']
    %8 = vsyncpa [#allocation4], 0
    %9 = vsyncpa [#allocation5], 0
    %s10 = scalar_lea.sflag [#allocation5], 1
    %11 = vsyncpa %s10, 0
    loop: start=0, step=1, limit=4
    $region2: #{tpu_custom_call.1} parent=1 // loop_pre_header
      _
    $region3: #{tpu_custom_call.1} parent=1 // loop_header
      %s13 = sphi 0, %s17
      %p14 = scmp.ge.s32.totalorder %s13, 4
      %s20 = sphi 0, %s39
      %s21 = sphi 0, %s35
      %s22 = sphi 0, %s31
      %s23 = sphi 0, %s20
      %s24 = sphi 0, %s21
      %s25 = sphi 0, %s22
      %s26 = sphi 0, %s23
      %s27 = sphi 0, %s24
      %s28 = sphi 0, %s25
      %s44 = sphi 0, %s46
      %s47 = sphi 0, %s44
      %s48 = sphi 0, %s47
      %s64 = sphi 0, %s48
      %s72 = sphi 0, %s74
      %s75 = sphi 0, %s72
      %s76 = sphi 0, %s75
      %s92 = sphi 0, %s76
      %s98 = sphi 0, %s100
      %s101 = sphi 0, %s98
      %s102 = sphi 0, %s101
      %s118 = sphi 0, %s102
      %s126 = sphi 0, %s128
      %s129 = sphi 0, %s126
      %s130 = sphi 0, %s129
      %s146 = sphi 0, %s130
    $region4: #{tpu_custom_call.1} parent=1 // loop_header_branch
      %16 = sbr.rel (%p14) target = $region8
    $region5: #{tpu_custom_call.1} parent=1 // loop_body
      %s18 = ssub.s32 %s13, 1
      %s19 = ssub.s32 %s13, 2
      %s29 = sadd.s32 1, %s22
      %p30 = scmp.ge.s32.totalorder %s29, 1
      %s31 = scalar_select %p30, 0, %s29
      %s32 = sadd.s32 1, %s21
      %s33 = scalar_select %p30, %s32, %s21
      %p34 = scmp.ge.s32.totalorder %s33, 1
      %s35 = scalar_select %p34, 0, %s33
      %s36 = sadd.s32 1, %s20
      %s37 = scalar_select %p34, %s36, %s20
      %p38 = scmp.ge.s32.totalorder %s37, 2
      %s39 = scalar_select %p38, 0, %s37
      %s40 = ssub.s32 %s20, %s39
      %s41 = ssub.s32 %s22, %s31
      %s42 = sor.u32 %s40, %s41
      %p43 = scmp.eq.s32.totalorder %s42, 0
      %s45 = sadd.s32 %s44, 1
      %s46 = scalar_select %p43, %s44, %s45
      %p49 = pneg %p43
      %p50 = scmp.eq.s32.totalorder %s13, 1
      %p51 = por %p49, %p50
      %p52 = scmp.ne.s32.totalorder %s44, %s47
      %p53 = scmp.eq.s32.totalorder %s13, 0
      %p54 = por %p52, %p53
      %p55 = scmp.ne.s32.totalorder %s44, %s47
      %p56 = scmp.eq.s32.totalorder %s18, 1
      %p57 = por %p55, %p56
      %p58 = scmp.ne.s32.totalorder %s47, %s48
      %p59 = scmp.eq.s32.totalorder %s18, 0
      %p60 = por %p58, %p59
      %p61 = scmp.ne.s32.totalorder %s47, %s48
      %p62 = scmp.eq.s32.totalorder %s19, 1
      %p63 = por %p61, %p62
      %p65 = scmp.ne.s32.totalorder %s48, %s64
      %p66 = scmp.eq.s32.totalorder %s19, 0
      %p67 = por %p65, %p66
      %s68 = ssub.s32 %s22, %s31
      %s69 = ssub.s32 %s21, %s35
      %s70 = sor.u32 %s68, %s69
      %p71 = scmp.eq.s32.totalorder %s70, 0
      %s73 = sadd.s32 %s72, 1
      %s74 = scalar_select %p71, %s72, %s73
      %p77 = pneg %p71
      %p78 = scmp.eq.s32.totalorder %s13, 1
      %p79 = por %p77, %p78
      %p80 = scmp.ne.s32.totalorder %s72, %s75
      %p81 = scmp.eq.s32.totalorder %s13, 0
      %p82 = por %p80, %p81
      %p83 = scmp.ne.s32.totalorder %s72, %s75
      %p84 = scmp.eq.s32.totalorder %s18, 1
      %p85 = por %p83, %p84
      %p86 = scmp.ne.s32.totalorder %s75, %s76
      %p87 = scmp.eq.s32.totalorder %s18, 0
      %p88 = por %p86, %p87
      %p89 = scmp.ne.s32.totalorder %s75, %s76
      %p90 = scmp.eq.s32.totalorder %s19, 1
      %p91 = por %p89, %p90
      %p93 = scmp.ne.s32.totalorder %s76, %s92
      %p94 = scmp.eq.s32.totalorder %s19, 0
      %p95 = por %p93, %p94
      %s96 = ssub.s32 %s21, %s35
      %p97 = scmp.eq.s32.totalorder %s96, 0
      %s99 = sadd.s32 %s98, 1
      %s100 = scalar_select %p97, %s98, %s99
      %p103 = pneg %p97
      %p104 = scmp.eq.s32.totalorder %s13, 1
      %p105 = por %p103, %p104
      %p106 = scmp.ne.s32.totalorder %s98, %s101
      %p107 = scmp.eq.s32.totalorder %s13, 0
      %p108 = por %p106, %p107
      %p109 = scmp.ne.s32.totalorder %s98, %s101
      %p110 = scmp.eq.s32.totalorder %s18, 1
      %p111 = por %p109, %p110
      %p112 = scmp.ne.s32.totalorder %s101, %s102
      %p113 = scmp.eq.s32.totalorder %s18, 0
      %p114 = por %p112, %p113
      %p115 = scmp.ne.s32.totalorder %s101, %s102
      %p116 = scmp.eq.s32.totalorder %s19, 1
      %p117 = por %p115, %p116
      %p119 = scmp.ne.s32.totalorder %s102, %s118
      %p120 = scmp.eq.s32.totalorder %s19, 0
      %p121 = por %p119, %p120
      %s122 = ssub.s32 %s20, %s39
      %s123 = ssub.s32 %s21, %s35
      %s124 = sor.u32 %s122, %s123
      %p125 = scmp.eq.s32.totalorder %s124, 0
      %s127 = sadd.s32 %s126, 1
      %s128 = scalar_select %p125, %s126, %s127
      %p131 = pneg %p125
      %p132 = scmp.eq.s32.totalorder %s13, 1
      %p133 = por %p131, %p132
      %p134 = scmp.ne.s32.totalorder %s126, %s129
      %p135 = scmp.eq.s32.totalorder %s13, 0
      %p136 = por %p134, %p135
      %p137 = scmp.ne.s32.totalorder %s126, %s129
      %p138 = scmp.eq.s32.totalorder %s18, 1
      %p139 = por %p137, %p138
      %p140 = scmp.ne.s32.totalorder %s129, %s130
      %p141 = scmp.eq.s32.totalorder %s18, 0
      %p142 = por %p140, %p141
      %p143 = scmp.ne.s32.totalorder %s129, %s130
      %p144 = scmp.eq.s32.totalorder %s19, 1
      %p145 = por %p143, %p144
      %p147 = scmp.ne.s32.totalorder %s130, %s146
      %p148 = scmp.eq.s32.totalorder %s19, 0
      %p149 = por %p147, %p148
      %p150 = scmp.le.s32.totalorder 1, %s13
      %p151 = scmp.lt.s32.totalorder %s13, 3
      %p152 = pnand %p150, %p151
      %p153 = pneg %p152
      // Predicated region
      $region9: #{tpu_custom_call.1} parent=5 // pred_check
        _
      $region10: #{tpu_custom_call.1} parent=5 // pred_check_branch
        %155 = sbr.rel (%p152) target = $region12
      $region11: #{tpu_custom_call.1} parent=5 // pred_region
        %s156 = ssub.s32 %s13, 1
        // Predicated region
        $region13: #{tpu_custom_call.1} parent=11 // pred_check
          %p157 = pneg %p88
        $region14: #{tpu_custom_call.1} parent=11 // pred_check_branch
          %159 = sbr.rel (%p157) target = $region16
        $region15: #{tpu_custom_call.1} parent=11 // pred_region
          %s160 = smul.u32 16, %s25
          %162 = vsyncadd [#allocation4], 0
          %s163 = sadd.s32 %s24, %s160
          %s164 = smul.addr %s163, 4
          %s165 = scalar_lea.hbm %s1, %s164
          %s166 = sshll.u32 %s165, 4
          %s167 = int_to_ptr.hbm [resolvable:$true] %s166
          %s168 = sshll.u32 [#allocation3], 4
          %s169 = int_to_ptr.vmem [resolvable:$true] %s168
          %174 = dma.hbm_to_vmem [thread:$0]  %s167, 9216, %s169, [#allocation4], 64, 64, 4
        $region16: #{tpu_custom_call.1} parent=11 // pred_fallthru
          _
        // Predicated region
        $region17: #{tpu_custom_call.1} parent=11 // pred_check
          %p175 = pneg %p114
        $region18: #{tpu_custom_call.1} parent=11 // pred_check_branch
          %177 = sbr.rel (%p175) target = $region20
        $region19: #{tpu_custom_call.1} parent=11 // pred_region
          %p178 = scmp.lt.s32.totalorder %s24, 0
          %s179 = scalar_select %p178, %s24, 0
          %s180 = scalar_lea.vmem %s2, %s179
        $region20: #{tpu_custom_call.1} parent=11 // pred_fallthru
          _
      $region12: #{tpu_custom_call.1} parent=5 // pred_fallthru
        _
      %p181 = scmp.lt.s32.totalorder %s13, 2
      // Predicated region
      $region21: #{tpu_custom_call.1} parent=5 // pred_check
        %p182 = pneg %p181
      $region22: #{tpu_custom_call.1} parent=5 // pred_check_branch
        %184 = sbr.rel (%p182) target = $region24
      $region23: #{tpu_custom_call.1} parent=5 // pred_region
        // Predicated region
        $region25: #{tpu_custom_call.1} parent=23 // pred_check
          %p185 = pneg %p54
        $region26: #{tpu_custom_call.1} parent=23 // pred_check_branch
          %187 = sbr.rel (%p185) target = $region28
        $region27: #{tpu_custom_call.1} parent=23 // pred_region
          %p188 = scmp.lt.s32.totalorder %s20, 1
          %s189 = scalar_select %p188, %s20, 1
          %p190 = scmp.lt.s32.totalorder %s22, 0
          %s191 = scalar_select %p190, %s22, 0
          %s192 = smul.addr %s189, 14
          %s193 = sadd.s32 %s191, %s192
          %s194 = smul.addr %s193, 4
          %s195 = scalar_lea.vmem %s0, %s194
        $region28: #{tpu_custom_call.1} parent=23 // pred_fallthru
          _
      $region24: #{tpu_custom_call.1} parent=5 // pred_fallthru
        _
      %p196 = scmp.le.s32.totalorder 1, %s13
      %p197 = scmp.lt.s32.totalorder %s13, 3
      %p198 = pnand %p196, %p197
      %p199 = pneg %p198
      // Predicated region
      $region29: #{tpu_custom_call.1} parent=5 // pred_check
        _
      $region30: #{tpu_custom_call.1} parent=5 // pred_check_branch
        %201 = sbr.rel (%p198) target = $region32
      $region31: #{tpu_custom_call.1} parent=5 // pred_region
        %s202 = ssub.s32 %s13, 1
        // Predicated region
        $region33: #{tpu_custom_call.1} parent=31 // pred_check
          %p203 = pneg %p88
        $region34: #{tpu_custom_call.1} parent=31 // pred_check_branch
          %205 = sbr.rel (%p203) target = $region36
        $region35: #{tpu_custom_call.1} parent=31 // pred_region
          %207 = dma.done [#allocation4], 9216
        $region36: #{tpu_custom_call.1} parent=31 // pred_fallthru
          _
        %p208 = scmp.lt.s32.totalorder %s23, 1
        %s209 = scalar_select %p208, %s23, 1
        %p210 = scmp.lt.s32.totalorder %s25, 0
        %s211 = scalar_select %p210, %s25, 0
        %s212 = smul.addr %s209, 14
        %s213 = sadd.s32 %s211, %s212
        %s214 = smul.addr %s213, 4
        %s215 = scalar_lea.vmem %s0, %s214
        %p216 = pneg %p60
        %p217 = pneg %p57
        %p218 = pneg %p88
        %p219 = pneg %p85
        %p220 = scmp.lt.s32.totalorder %s24, 0
        %s221 = scalar_select %p220, %s24, 0
        %s222 = scalar_lea.vmem %s2, %s221
        %p223 = pneg %p114
        %p224 = pneg %p111
        %p225 = pneg %p142
        %p226 = pneg %p139
        %s227 = sand.u32 %s129, 1
        %s228 = scalar_lea.sflag [#allocation5], %s227
        %s229 = sand.u32 %s129, 1
        %s230 = smul.addr %s229, 40
        %s231 = scalar_lea.vmem [#allocation6], %s230
        %p232 = scmp.lt.s32.totalorder %s23, 1
        %s233 = scalar_select %p232, %s23, 1
        %p234 = scmp.lt.s32.totalorder %s25, 0
        %s235 = scalar_select %p234, %s25, 0
        %s236 = smul.addr %s233, 14
        %s237 = sadd.s32 %s235, %s236
        %s238 = smul.addr %s237, 4
        %s239 = scalar_lea.vmem %s0, %s238
        %s240 = smul.u32 16, %s25
        %p241 = scmp.lt.s32.totalorder %s24, 0
        %s242 = scalar_select %p241, %s24, 0
        %s243 = scalar_lea.vmem %s2, %s242
        %p244 = scmp.eq.s32.totalorder %s25, 0
        // Predicated region
        $region37: #{tpu_custom_call.1} parent=31 // pred_check
          %p245 = pneg %p244
        $region38: #{tpu_custom_call.1} parent=31 // pred_check_branch
          %247 = sbr.rel (%p245) target = $region40
        $region39: #{tpu_custom_call.1} parent=31 // pred_region
          %248 = vst [vmem:[#allocation2] sm:$0xff] 0.0
          %249 = vst [vmem:[#allocation2 + $0x8] sm:$0xff] 0.0
          %250 = vst [vmem:[#allocation2 + $0x10] sm:$0xff] 0.0
          %251 = vst [vmem:[#allocation2 + $0x18] sm:$0xff] 0.0
          %252 = vst [vmem:[#allocation2 + $0x20] sm:$0xff] 0.0
          %253 = vst [vmem:[#allocation2 + $0x28] sm:$0xff] 0.0
          %254 = vst [vmem:[#allocation2 + $0x30] sm:$0xff] 0.0
          %255 = vst [vmem:[#allocation2 + $0x38] sm:$0xff] 0.0
          %256 = vst [vmem:[#allocation2 + $0x40] sm:$0xff] 0.0
          %257 = vst [vmem:[#allocation2 + $0x48] sm:$0xff] 0.0
        $region40: #{tpu_custom_call.1} parent=31 // pred_fallthru
          _
        %v258 = vld [vmem:[#allocation2] sm:$0xff]
        %v259 = vld [vmem:[#allocation2 + $0x8] sm:$0xff]
        %v260 = vld [vmem:[#allocation2 + $0x10] sm:$0xff]
        %v261 = vld [vmem:[#allocation2 + $0x18] sm:$0xff]
        %v262 = vld [vmem:[#allocation2 + $0x20] sm:$0xff]
        %v263 = vld [vmem:[#allocation2 + $0x28] sm:$0xff]
        %v264 = vld [vmem:[#allocation2 + $0x30] sm:$0xff]
        %v265 = vld [vmem:[#allocation2 + $0x38] sm:$0xff]
        %v266 = vld [vmem:[#allocation2 + $0x40] sm:$0xff]
        %v267 = vld [vmem:[#allocation2 + $0x48] sm:$0xff]
        %v268 = vld [vmem:[%s239] sm:$0xf]
        %v269 = vld [vmem:[%s239 + $0x4] sm:$0xf]
        %v270 = vld [vmem:[%s239 + $0x8] sm:$0xf]
        %v271 = vld [vmem:[%s239 + $0xc] sm:$0xf]
        %v272 = vld [vmem:[%s239 + $0x10] sm:$0xf]
        %v273 = vld [vmem:[%s239 + $0x14] sm:$0xf]
        %v274 = vld [vmem:[%s239 + $0x18] sm:$0xf]
        %v275 = vld [vmem:[%s239 + $0x1c] sm:$0xf]
        %v276 = vld [vmem:[%s239 + $0x20] sm:$0xf]
        %v277 = vld [vmem:[%s239 + $0x24] sm:$0xf]
        %v278 = vld [vmem:[#allocation3] sm:$0xf]
        %v279 = vld [vmem:[#allocation3 + $0x4] sm:$0xf]
        %v280 = vld [vmem:[#allocation3 + $0x8] sm:$0xf]
        %v281 = vld [vmem:[#allocation3 + $0xc] sm:$0xf]
        %v282 = vld [vmem:[#allocation3 + $0x10] sm:$0xf]
        %v283 = vld [vmem:[#allocation3 + $0x14] sm:$0xf]
        %v284 = vld [vmem:[#allocation3 + $0x18] sm:$0xf]
        %v285 = vld [vmem:[#allocation3 + $0x1c] sm:$0xf]
        %v286 = vld [vmem:[#allocation3 + $0x20] sm:$0xf]
        %v287 = vld [vmem:[#allocation3 + $0x24] sm:$0xf]
        %v288 = vld [vmem:[#allocation3 + $0x28] sm:$0xf]
        %v289 = vld [vmem:[#allocation3 + $0x2c] sm:$0xf]
        %v290 = vld [vmem:[#allocation3 + $0x30] sm:$0xf]
        %v291 = vld [vmem:[#allocation3 + $0x34] sm:$0xf]
        %v292 = vld [vmem:[#allocation3 + $0x38] sm:$0xf]
        %v293 = vld [vmem:[#allocation3 + $0x3c] sm:$0xf]
        %v304 = vunpack.c.l.b16 %v268
        %v305 = vunpack.c.l.b16 %v269
        %v306 = vunpack.c.l.b16 %v270
        %v307 = vunpack.c.l.b16 %v271
        %v308 = vunpack.c.l.b16 %v272
        %v309 = vunpack.c.l.b16 %v273
        %v310 = vunpack.c.l.b16 %v274
        %v311 = vunpack.c.l.b16 %v275
        %v312 = vunpack.c.l.b16 %v276
        %v313 = vunpack.c.l.b16 %v277
        %v314 = vpack.c.b16 %v305, %v304
        %v315 = vpack.c.b16 %v307, %v306
        %v316 = vpack.c.b16 %v309, %v308
        %v317 = vpack.c.b16 %v311, %v310
        %v318 = vpack.c.b16 %v313, %v312
        %v340 = vunpack.c.l.b16 %v278
        %v341 = vunpack.c.l.b16 %v279
        %v342 = vunpack.c.l.b16 %v280
        %v343 = vunpack.c.l.b16 %v281
        %v344 = vunpack.c.l.b16 %v282
        %v345 = vunpack.c.l.b16 %v283
        %v346 = vunpack.c.l.b16 %v284
        %v347 = vunpack.c.l.b16 %v285
        %v348 = vunpack.c.l.b16 %v286
        %v349 = vunpack.c.l.b16 %v287
        %v350 = vunpack.c.l.b16 %v288
        %v351 = vunpack.c.l.b16 %v289
        %v352 = vunpack.c.l.b16 %v290
        %v353 = vunpack.c.l.b16 %v291
        %v354 = vunpack.c.l.b16 %v292
        %v355 = vunpack.c.l.b16 %v293
        %v356 = vpack.c.b16 %v341, %v340
        %v357 = vpack.c.b16 %v343, %v342
        %v358 = vpack.c.b16 %v345, %v344
        %v359 = vpack.c.b16 %v347, %v346
        %v360 = vpack.c.b16 %v349, %v348
        %v361 = vpack.c.b16 %v351, %v350
        %v362 = vpack.c.b16 %v353, %v352
        %v363 = vpack.c.b16 %v355, %v354
        %372 = vmatpush.bf16.msra.mxu0 %v363
        %373 = vmatpush.bf16.msra.mxu0 %v362
        %374 = vmatpush.bf16.msra.mxu0 %v361
        %375 = vmatpush.bf16.msra.mxu0 %v360
        %376 = vmatpush.bf16.msra.mxu0 %v359
        %377 = vmatpush.bf16.msra.mxu0 %v358
        %378 = vmatpush.bf16.msra.mxu0 %v357
        %379 = vmatpush.bf16.msra.mxu0 %v356
        %380 = vmatmul.bf16.gmra.mxu0 %v314
        %v381 = vpop.f32.mrf.mxu0
        %v382 = vadd.f32 0.0, %v381
        %v383 = vpop.f32.mrf.mxu0
        %v384 = vadd.f32 0.0, %v383
        %385 = vmatmul.bf16.gmra.mxu0 %v315
        %v386 = vpop.f32.mrf.mxu0
        %v387 = vadd.f32 0.0, %v386
        %v388 = vpop.f32.mrf.mxu0
        %v389 = vadd.f32 0.0, %v388
        %390 = vmatmul.bf16.gmra.mxu0 %v316
        %v391 = vpop.f32.mrf.mxu0
        %v392 = vadd.f32 0.0, %v391
        %v393 = vpop.f32.mrf.mxu0
        %v394 = vadd.f32 0.0, %v393
        %395 = vmatmul.bf16.gmra.mxu0 %v317
        %v396 = vpop.f32.mrf.mxu0
        %v397 = vadd.f32 0.0, %v396
        %v398 = vpop.f32.mrf.mxu0
        %v399 = vadd.f32 0.0, %v398
        %400 = vmatmul.bf16.gmra.mxu0 %v318
        %v401 = vpop.f32.mrf.mxu0
        %v402 = vadd.f32 0.0, %v401
        %v403 = vpop.f32.mrf.mxu0
        %v404 = vadd.f32 0.0, %v403
        %405 = vdwg.mxu0
        %v406 = vadd.f32 %v258, %v382
        %v407 = vadd.f32 %v259, %v384
        %v408 = vadd.f32 %v260, %v387
        %v409 = vadd.f32 %v261, %v389
        %v410 = vadd.f32 %v262, %v392
        %v411 = vadd.f32 %v263, %v394
        %v412 = vadd.f32 %v264, %v397
        %v413 = vadd.f32 %v265, %v399
        %v414 = vadd.f32 %v266, %v402
        %v415 = vadd.f32 %v267, %v404
        %v416 = vld [vmem:[%s239] sm:$0xf]
        %v417 = vld [vmem:[%s239 + $0x4] sm:$0xf]
        %v418 = vld [vmem:[%s239 + $0x8] sm:$0xf]
        %v419 = vld [vmem:[%s239 + $0xc] sm:$0xf]
        %v420 = vld [vmem:[%s239 + $0x10] sm:$0xf]
        %v421 = vld [vmem:[%s239 + $0x14] sm:$0xf]
        %v422 = vld [vmem:[%s239 + $0x18] sm:$0xf]
        %v423 = vld [vmem:[%s239 + $0x1c] sm:$0xf]
        %v424 = vld [vmem:[%s239 + $0x20] sm:$0xf]
        %v425 = vld [vmem:[%s239 + $0x24] sm:$0xf]
        %v426 = vld [vmem:[%s239 + $0x28] sm:$0x1]
        %s427 = scalar_lea.vmem [#allocation3], 64
        %v428 = vld [vmem:[%s427] sm:$0xf]
        %v429 = vld [vmem:[%s427 + $0x4] sm:$0xf]
        %v430 = vld [vmem:[%s427 + $0x8] sm:$0xf]
        %v431 = vld [vmem:[%s427 + $0xc] sm:$0xf]
        %v432 = vld [vmem:[%s427 + $0x10] sm:$0xf]
        %v433 = vld [vmem:[%s427 + $0x14] sm:$0xf]
        %v434 = vld [vmem:[%s427 + $0x18] sm:$0xf]
        %v435 = vld [vmem:[%s427 + $0x1c] sm:$0xf]
        %v436 = vld [vmem:[%s427 + $0x20] sm:$0xf]
        %v437 = vld [vmem:[%s427 + $0x24] sm:$0xf]
        %v438 = vld [vmem:[%s427 + $0x28] sm:$0xf]
        %v439 = vld [vmem:[%s427 + $0x2c] sm:$0xf]
        %v440 = vld [vmem:[%s427 + $0x30] sm:$0xf]
        %v441 = vld [vmem:[%s427 + $0x34] sm:$0xf]
        %v442 = vld [vmem:[%s427 + $0x38] sm:$0xf]
        %v443 = vld [vmem:[%s427 + $0x3c] sm:$0xf]
        %v455 = vunpack.c.l.b16 %v416
        %v456 = vunpack.c.l.b16 %v417
        %v457 = vunpack.c.l.b16 %v418
        %v458 = vunpack.c.l.b16 %v419
        %v459 = vunpack.c.l.b16 %v420
        %v460 = vunpack.c.l.b16 %v421
        %v461 = vunpack.c.l.b16 %v422
        %v462 = vunpack.c.l.b16 %v423
        %v463 = vunpack.c.l.b16 %v424
        %v464 = vunpack.c.l.b16 %v425
        %v465 = vunpack.c.l.b16 %v426
        %v466 = vpack.c.b16 %v456, %v455
        %v467 = vpack.c.b16 %v458, %v457
        %v468 = vpack.c.b16 %v460, %v459
        %v469 = vpack.c.b16 %v462, %v461
        %v470 = vpack.c.b16 %v464, %v463
        %v471 = vpack.c.b16 %v465, %v465
        %vm472 = vsmask.f32 7424
        %v474 = vshrl.u32 %v466, 16
        %v476 = vshll.u32 %v466, 16
        %v478 = vrot.slane %v476, 1
        %v479 = vor.u32 %v474, %v478
        %v481 = vshll.u32 %v467, 16
        %v483 = vrot.slane %v481, 1
        %v484 = vsel %vm472, %v479, %v483
        %v485 = vshrl.u32 %v467, 16
        %v487 = vor.u32 %v485, %v483
        %v489 = vshll.u32 %v468, 16
        %v491 = vrot.slane %v489, 1
        %v492 = vsel %vm472, %v487, %v491
        %v493 = vshrl.u32 %v468, 16
        %v495 = vor.u32 %v493, %v491
        %v497 = vshll.u32 %v469, 16
        %v499 = vrot.slane %v497, 1
        %v500 = vsel %vm472, %v495, %v499
        %v501 = vshrl.u32 %v469, 16
        %v503 = vor.u32 %v501, %v499
        %v505 = vshll.u32 %v470, 16
        %v507 = vrot.slane %v505, 1
        %v508 = vsel %vm472, %v503, %v507
        %v509 = vshrl.u32 %v470, 16
        %v511 = vor.u32 %v509, %v507
        %v513 = vshll.u32 %v471, 16
        %v515 = vrot.slane %v513, 1
        %v516 = vsel %vm472, %v511, %v515
        %v538 = vunpack.c.l.b16 %v428
        %v539 = vunpack.c.l.b16 %v429
        %v540 = vunpack.c.l.b16 %v430
        %v541 = vunpack.c.l.b16 %v431
        %v542 = vunpack.c.l.b16 %v432
        %v543 = vunpack.c.l.b16 %v433
        %v544 = vunpack.c.l.b16 %v434
        %v545 = vunpack.c.l.b16 %v435
        %v546 = vunpack.c.l.b16 %v436
        %v547 = vunpack.c.l.b16 %v437
        %v548 = vunpack.c.l.b16 %v438
        %v549 = vunpack.c.l.b16 %v439
        %v550 = vunpack.c.l.b16 %v440
        %v551 = vunpack.c.l.b16 %v441
        %v552 = vunpack.c.l.b16 %v442
        %v553 = vunpack.c.l.b16 %v443
        %v554 = vpack.c.b16 %v539, %v538
        %v555 = vpack.c.b16 %v541, %v540
        %v556 = vpack.c.b16 %v543, %v542
        %v557 = vpack.c.b16 %v545, %v544
        %v558 = vpack.c.b16 %v547, %v546
        %v559 = vpack.c.b16 %v549, %v548
        %v560 = vpack.c.b16 %v551, %v550
        %v561 = vpack.c.b16 %v553, %v552
        %570 = vmatpush.bf16.msra.mxu0 %v561
        %571 = vmatpush.bf16.msra.mxu0 %v560
        %572 = vmatpush.bf16.msra.mxu0 %v559
        %573 = vmatpush.bf16.msra.mxu0 %v558
        %574 = vmatpush.bf16.msra.mxu0 %v557
        %575 = vmatpush.bf16.msra.mxu0 %v556
        %576 = vmatpush.bf16.msra.mxu0 %v555
        %577 = vmatpush.bf16.msra.mxu0 %v554
        %578 = vmatmul.bf16.gmra.mxu0 %v484
        %v579 = vpop.f32.mrf.mxu0
        %v580 = vadd.f32 0.0, %v579
        %v581 = vpop.f32.mrf.mxu0
        %v582 = vadd.f32 0.0, %v581
        %583 = vmatmul.bf16.gmra.mxu0 %v492
        %v584 = vpop.f32.mrf.mxu0
        %v585 = vadd.f32 0.0, %v584
        %v586 = vpop.f32.mrf.mxu0
        %v587 = vadd.f32 0.0, %v586
        %588 = vmatmul.bf16.gmra.mxu0 %v500
        %v589 = vpop.f32.mrf.mxu0
        %v590 = vadd.f32 0.0, %v589
        %v591 = vpop.f32.mrf.mxu0
        %v592 = vadd.f32 0.0, %v591
        %593 = vmatmul.bf16.gmra.mxu0 %v508
        %v594 = vpop.f32.mrf.mxu0
        %v595 = vadd.f32 0.0, %v594
        %v596 = vpop.f32.mrf.mxu0
        %v597 = vadd.f32 0.0, %v596
        %598 = vmatmul.bf16.gmra.mxu0 %v516
        %v599 = vpop.f32.mrf.mxu0
        %v600 = vadd.f32 0.0, %v599
        %v601 = vpop.f32.mrf.mxu0
        %v602 = vadd.f32 0.0, %v601
        %603 = vdwg.mxu0
        %v604 = vadd.f32 %v406, %v580
        %v605 = vadd.f32 %v407, %v582
        %v606 = vadd.f32 %v408, %v585
        %v607 = vadd.f32 %v409, %v587
        %v608 = vadd.f32 %v410, %v590
        %v609 = vadd.f32 %v411, %v592
        %v610 = vadd.f32 %v412, %v595
        %v611 = vadd.f32 %v413, %v597
        %v612 = vadd.f32 %v414, %v600
        %v613 = vadd.f32 %v415, %v602
        %v614 = vld [vmem:[%s239] sm:$0xe]
        %s615 = scalar_lea.vmem [#allocation3], 128
        %v616 = vld [vmem:[%s615] sm:$0xf]
        %v617 = vld [vmem:[%s615 + $0x4] sm:$0xf]
        %v618 = vld [vmem:[%s615 + $0x8] sm:$0xf]
        %v619 = vld [vmem:[%s615 + $0xc] sm:$0xf]
        %v620 = vld [vmem:[%s615 + $0x10] sm:$0xf]
        %v621 = vld [vmem:[%s615 + $0x14] sm:$0xf]
        %v622 = vld [vmem:[%s615 + $0x18] sm:$0xf]
        %v623 = vld [vmem:[%s615 + $0x1c] sm:$0xf]
        %v624 = vld [vmem:[%s615 + $0x20] sm:$0xf]
        %v625 = vld [vmem:[%s615 + $0x24] sm:$0xf]
        %v626 = vld [vmem:[%s615 + $0x28] sm:$0xf]
        %v627 = vld [vmem:[%s615 + $0x2c] sm:$0xf]
        %v628 = vld [vmem:[%s615 + $0x30] sm:$0xf]
        %v629 = vld [vmem:[%s615 + $0x34] sm:$0xf]
        %v630 = vld [vmem:[%s615 + $0x38] sm:$0xf]
        %v631 = vld [vmem:[%s615 + $0x3c] sm:$0xf]
        %v633 = vunpack.c.l.b16 %v614
        %v634 = vpack.c.b16 %v456, %v633
        %vm635 = vcmask 1046528
        %v636 = vrot.slane %v634, 1
        %v637 = vrot.slane %v467, 1
        %v638 = vsel %vm635, %v636, %v637
        %v639 = vrot.slane %v468, 1
        %v640 = vsel %vm635, %v637, %v639
        %v641 = vrot.slane %v469, 1
        %v642 = vsel %vm635, %v639, %v641
        %v643 = vrot.slane %v470, 1
        %v644 = vsel %vm635, %v641, %v643
        %v645 = vrot.slane %v471, 1
        %v646 = vsel %vm635, %v643, %v645
        %v668 = vunpack.c.l.b16 %v616
        %v669 = vunpack.c.l.b16 %v617
        %v670 = vunpack.c.l.b16 %v618
        %v671 = vunpack.c.l.b16 %v619
        %v672 = vunpack.c.l.b16 %v620
        %v673 = vunpack.c.l.b16 %v621
        %v674 = vunpack.c.l.b16 %v622
        %v675 = vunpack.c.l.b16 %v623
        %v676 = vunpack.c.l.b16 %v624
        %v677 = vunpack.c.l.b16 %v625
        %v678 = vunpack.c.l.b16 %v626
        %v679 = vunpack.c.l.b16 %v627
        %v680 = vunpack.c.l.b16 %v628
        %v681 = vunpack.c.l.b16 %v629
        %v682 = vunpack.c.l.b16 %v630
        %v683 = vunpack.c.l.b16 %v631
        %v684 = vpack.c.b16 %v669, %v668
        %v685 = vpack.c.b16 %v671, %v670
        %v686 = vpack.c.b16 %v673, %v672
        %v687 = vpack.c.b16 %v675, %v674
        %v688 = vpack.c.b16 %v677, %v676
        %v689 = vpack.c.b16 %v679, %v678
        %v690 = vpack.c.b16 %v681, %v680
        %v691 = vpack.c.b16 %v683, %v682
        %700 = vmatpush.bf16.msra.mxu0 %v691
        %701 = vmatpush.bf16.msra.mxu0 %v690
        %702 = vmatpush.bf16.msra.mxu0 %v689
        %703 = vmatpush.bf16.msra.mxu0 %v688
        %704 = vmatpush.bf16.msra.mxu0 %v687
        %705 = vmatpush.bf16.msra.mxu0 %v686
        %706 = vmatpush.bf16.msra.mxu0 %v685
        %707 = vmatpush.bf16.msra.mxu0 %v684
        %708 = vmatmul.bf16.gmra.mxu0 %v638
        %v709 = vpop.f32.mrf.mxu0
        %v710 = vadd.f32 0.0, %v709
        %v711 = vpop.f32.mrf.mxu0
        %v712 = vadd.f32 0.0, %v711
        %713 = vmatmul.bf16.gmra.mxu0 %v640
        %v714 = vpop.f32.mrf.mxu0
        %v715 = vadd.f32 0.0, %v714
        %v716 = vpop.f32.mrf.mxu0
        %v717 = vadd.f32 0.0, %v716
        %718 = vmatmul.bf16.gmra.mxu0 %v642
        %v719 = vpop.f32.mrf.mxu0
        %v720 = vadd.f32 0.0, %v719
        %v721 = vpop.f32.mrf.mxu0
        %v722 = vadd.f32 0.0, %v721
        %723 = vmatmul.bf16.gmra.mxu0 %v644
        %v724 = vpop.f32.mrf.mxu0
        %v725 = vadd.f32 0.0, %v724
        %v726 = vpop.f32.mrf.mxu0
        %v727 = vadd.f32 0.0, %v726
        %728 = vmatmul.bf16.gmra.mxu0 %v646
        %v729 = vpop.f32.mrf.mxu0
        %v730 = vadd.f32 0.0, %v729
        %v731 = vpop.f32.mrf.mxu0
        %v732 = vadd.f32 0.0, %v731
        %733 = vdwg.mxu0
        %v734 = vadd.f32 %v604, %v710
        %v735 = vadd.f32 %v605, %v712
        %v736 = vadd.f32 %v606, %v715
        %v737 = vadd.f32 %v607, %v717
        %v738 = vadd.f32 %v608, %v720
        %v739 = vadd.f32 %v609, %v722
        %v740 = vadd.f32 %v610, %v725
        %v741 = vadd.f32 %v611, %v727
        %v742 = vadd.f32 %v612, %v730
        %v743 = vadd.f32 %v613, %v732
        %v744 = vld [vmem:[%s239 + $0x4] sm:$0xe]
        %v745 = vld [vmem:[%s239 + $0x8] sm:$0xf]
        %v746 = vld [vmem:[%s239 + $0xc] sm:$0xf]
        %v747 = vld [vmem:[%s239 + $0x10] sm:$0xf]
        %v748 = vld [vmem:[%s239 + $0x14] sm:$0xf]
        %v749 = vld [vmem:[%s239 + $0x18] sm:$0xf]
        %v750 = vld [vmem:[%s239 + $0x1c] sm:$0xf]
        %v751 = vld [vmem:[%s239 + $0x20] sm:$0xf]
        %v752 = vld [vmem:[%s239 + $0x24] sm:$0xf]
        %v753 = vld [vmem:[%s239 + $0x28] sm:$0xf]
        %v754 = vld [vmem:[%s239 + $0x2c] sm:$0x1]
        %s755 = scalar_lea.vmem [#allocation3], 192
        %v756 = vld [vmem:[%s755] sm:$0xf]
        %v757 = vld [vmem:[%s755 + $0x4] sm:$0xf]
        %v758 = vld [vmem:[%s755 + $0x8] sm:$0xf]
        %v759 = vld [vmem:[%s755 + $0xc] sm:$0xf]
        %v760 = vld [vmem:[%s755 + $0x10] sm:$0xf]
        %v761 = vld [vmem:[%s755 + $0x14] sm:$0xf]
        %v762 = vld [vmem:[%s755 + $0x18] sm:$0xf]
        %v763 = vld [vmem:[%s755 + $0x1c] sm:$0xf]
        %v764 = vld [vmem:[%s755 + $0x20] sm:$0xf]
        %v765 = vld [vmem:[%s755 + $0x24] sm:$0xf]
        %v766 = vld [vmem:[%s755 + $0x28] sm:$0xf]
        %v767 = vld [vmem:[%s755 + $0x2c] sm:$0xf]
        %v768 = vld [vmem:[%s755 + $0x30] sm:$0xf]
        %v769 = vld [vmem:[%s755 + $0x34] sm:$0xf]
        %v770 = vld [vmem:[%s755 + $0x38] sm:$0xf]
        %v771 = vld [vmem:[%s755 + $0x3c] sm:$0xf]
        %v783 = vunpack.c.l.b16 %v744
        %v784 = vunpack.c.l.b16 %v745
        %v785 = vunpack.c.l.b16 %v746
        %v786 = vunpack.c.l.b16 %v747
        %v787 = vunpack.c.l.b16 %v748
        %v788 = vunpack.c.l.b16 %v749
        %v789 = vunpack.c.l.b16 %v750
        %v790 = vunpack.c.l.b16 %v751
        %v791 = vunpack.c.l.b16 %v752
        %v792 = vunpack.c.l.b16 %v753
        %v793 = vunpack.c.l.b16 %v754
        %v794 = vpack.c.b16 %v784, %v783
        %v795 = vpack.c.b16 %v786, %v785
        %v796 = vpack.c.b16 %v788, %v787
        %v797 = vpack.c.b16 %v790, %v789
        %v798 = vpack.c.b16 %v792, %v791
        %v799 = vpack.c.b16 %v793, %v793
        %v800 = vrot.slane %v794, 1
        %v801 = vrot.slane %v795, 1
        %v802 = vsel %vm635, %v800, %v801
        %v803 = vrot.slane %v796, 1
        %v804 = vsel %vm635, %v801, %v803
        %v805 = vrot.slane %v797, 1
        %v806 = vsel %vm635, %v803, %v805
        %v807 = vrot.slane %v798, 1
        %v808 = vsel %vm635, %v805, %v807
        %v809 = vrot.slane %v799, 1
        %v810 = vsel %vm635, %v807, %v809
        %v832 = vunpack.c.l.b16 %v756
        %v833 = vunpack.c.l.b16 %v757
        %v834 = vunpack.c.l.b16 %v758
        %v835 = vunpack.c.l.b16 %v759
        %v836 = vunpack.c.l.b16 %v760
        %v837 = vunpack.c.l.b16 %v761
        %v838 = vunpack.c.l.b16 %v762
        %v839 = vunpack.c.l.b16 %v763
        %v840 = vunpack.c.l.b16 %v764
        %v841 = vunpack.c.l.b16 %v765
        %v842 = vunpack.c.l.b16 %v766
        %v843 = vunpack.c.l.b16 %v767
        %v844 = vunpack.c.l.b16 %v768
        %v845 = vunpack.c.l.b16 %v769
        %v846 = vunpack.c.l.b16 %v770
        %v847 = vunpack.c.l.b16 %v771
        %v848 = vpack.c.b16 %v833, %v832
        %v849 = vpack.c.b16 %v835, %v834
        %v850 = vpack.c.b16 %v837, %v836
        %v851 = vpack.c.b16 %v839, %v838
        %v852 = vpack.c.b16 %v841, %v840
        %v853 = vpack.c.b16 %v843, %v842
        %v854 = vpack.c.b16 %v845, %v844
        %v855 = vpack.c.b16 %v847, %v846
        %864 = vmatpush.bf16.msra.mxu0 %v855
        %865 = vmatpush.bf16.msra.mxu0 %v854
        %866 = vmatpush.bf16.msra.mxu0 %v853
        %867 = vmatpush.bf16.msra.mxu0 %v852
        %868 = vmatpush.bf16.msra.mxu0 %v851
        %869 = vmatpush.bf16.msra.mxu0 %v850
        %870 = vmatpush.bf16.msra.mxu0 %v849
        %871 = vmatpush.bf16.msra.mxu0 %v848
        %872 = vmatmul.bf16.gmra.mxu0 %v802
        %v873 = vpop.f32.mrf.mxu0
        %v874 = vadd.f32 0.0, %v873
        %v875 = vpop.f32.mrf.mxu0
        %v876 = vadd.f32 0.0, %v875
        %877 = vmatmul.bf16.gmra.mxu0 %v804
        %v878 = vpop.f32.mrf.mxu0
        %v879 = vadd.f32 0.0, %v878
        %v880 = vpop.f32.mrf.mxu0
        %v881 = vadd.f32 0.0, %v880
        %882 = vmatmul.bf16.gmra.mxu0 %v806
        %v883 = vpop.f32.mrf.mxu0
        %v884 = vadd.f32 0.0, %v883
        %v885 = vpop.f32.mrf.mxu0
        %v886 = vadd.f32 0.0, %v885
        %887 = vmatmul.bf16.gmra.mxu0 %v808
        %v888 = vpop.f32.mrf.mxu0
        %v889 = vadd.f32 0.0, %v888
        %v890 = vpop.f32.mrf.mxu0
        %v891 = vadd.f32 0.0, %v890
        %892 = vmatmul.bf16.gmra.mxu0 %v810
        %v893 = vpop.f32.mrf.mxu0
        %v894 = vadd.f32 0.0, %v893
        %v895 = vpop.f32.mrf.mxu0
        %v896 = vadd.f32 0.0, %v895
        %897 = vdwg.mxu0
        %v898 = vadd.f32 %v734, %v874
        %v899 = vadd.f32 %v735, %v876
        %v900 = vadd.f32 %v736, %v879
        %v901 = vadd.f32 %v737, %v881
        %v902 = vadd.f32 %v738, %v884
        %v903 = vadd.f32 %v739, %v886
        %v904 = vadd.f32 %v740, %v889
        %v905 = vadd.f32 %v741, %v891
        %v906 = vadd.f32 %v742, %v894
        %v907 = vadd.f32 %v743, %v896
        %v908 = vld [vmem:[%s239 + $0x2c] sm:$0x3]
        %s909 = scalar_lea.vmem [#allocation3], 256
        %v910 = vld [vmem:[%s909] sm:$0xf]
        %v911 = vld [vmem:[%s909 + $0x4] sm:$0xf]
        %v912 = vld [vmem:[%s909 + $0x8] sm:$0xf]
        %v913 = vld [vmem:[%s909 + $0xc] sm:$0xf]
        %v914 = vld [vmem:[%s909 + $0x10] sm:$0xf]
        %v915 = vld [vmem:[%s909 + $0x14] sm:$0xf]
        %v916 = vld [vmem:[%s909 + $0x18] sm:$0xf]
        %v917 = vld [vmem:[%s909 + $0x1c] sm:$0xf]
        %v918 = vld [vmem:[%s909 + $0x20] sm:$0xf]
        %v919 = vld [vmem:[%s909 + $0x24] sm:$0xf]
        %v920 = vld [vmem:[%s909 + $0x28] sm:$0xf]
        %v921 = vld [vmem:[%s909 + $0x2c] sm:$0xf]
        %v922 = vld [vmem:[%s909 + $0x30] sm:$0xf]
        %v923 = vld [vmem:[%s909 + $0x34] sm:$0xf]
        %v924 = vld [vmem:[%s909 + $0x38] sm:$0xf]
        %v925 = vld [vmem:[%s909 + $0x3c] sm:$0xf]
        %v927 = vunpack.c.l.b16 %v908
        %v928 = vpack.c.b16 %v927, %v927
        %vm929 = vsmask.f32 6400
        %v931 = vshrl.u32 %v794, 16
        %v933 = vrot.slane %v931, 1
        %v934 = vshll.u32 %v794, 16
        %v936 = vrot.slane %v934, 2
        %v937 = vor.u32 %v933, %v936
        %v939 = vshrl.u32 %v795, 16
        %v941 = vrot.slane %v939, 1
        %v942 = vshll.u32 %v795, 16
        %v944 = vrot.slane %v942, 2
        %v945 = vor.u32 %v941, %v944
        %v946 = vsel %vm929, %v937, %v945
        %v948 = vshrl.u32 %v796, 16
        %v950 = vrot.slane %v948, 1
        %v951 = vshll.u32 %v796, 16
        %v953 = vrot.slane %v951, 2
        %v954 = vor.u32 %v950, %v953
        %v955 = vsel %vm929, %v945, %v954
        %v957 = vshrl.u32 %v797, 16
        %v959 = vrot.slane %v957, 1
        %v960 = vshll.u32 %v797, 16
        %v962 = vrot.slane %v960, 2
        %v963 = vor.u32 %v959, %v962
        %v964 = vsel %vm929, %v954, %v963
        %v966 = vshrl.u32 %v798, 16
        %v968 = vrot.slane %v966, 1
        %v969 = vshll.u32 %v798, 16
        %v971 = vrot.slane %v969, 2
        %v972 = vor.u32 %v968, %v971
        %v973 = vsel %vm929, %v963, %v972
        %v975 = vshrl.u32 %v928, 16
        %v977 = vrot.slane %v975, 1
        %v978 = vshll.u32 %v928, 16
        %v980 = vrot.slane %v978, 2
        %v981 = vor.u32 %v977, %v980
        %v982 = vsel %vm929, %v972, %v981
        %v1004 = vunpack.c.l.b16 %v910
        %v1005 = vunpack.c.l.b16 %v911
        %v1006 = vunpack.c.l.b16 %v912
        %v1007 = vunpack.c.l.b16 %v913
        %v1008 = vunpack.c.l.b16 %v914
        %v1009 = vunpack.c.l.b16 %v915
        %v1010 = vunpack.c.l.b16 %v916
        %v1011 = vunpack.c.l.b16 %v917
        %v1012 = vunpack.c.l.b16 %v918
        %v1013 = vunpack.c.l.b16 %v919
        %v1014 = vunpack.c.l.b16 %v920
        %v1015 = vunpack.c.l.b16 %v921
        %v1016 = vunpack.c.l.b16 %v922
        %v1017 = vunpack.c.l.b16 %v923
        %v1018 = vunpack.c.l.b16 %v924
        %v1019 = vunpack.c.l.b16 %v925
        %v1020 = vpack.c.b16 %v1005, %v1004
        %v1021 = vpack.c.b16 %v1007, %v1006
        %v1022 = vpack.c.b16 %v1009, %v1008
        %v1023 = vpack.c.b16 %v1011, %v1010
        %v1024 = vpack.c.b16 %v1013, %v1012
        %v1025 = vpack.c.b16 %v1015, %v1014
        %v1026 = vpack.c.b16 %v1017, %v1016
        %v1027 = vpack.c.b16 %v1019, %v1018
        %1036 = vmatpush.bf16.msra.mxu0 %v1027
        %1037 = vmatpush.bf16.msra.mxu0 %v1026
        %1038 = vmatpush.bf16.msra.mxu0 %v1025
        %1039 = vmatpush.bf16.msra.mxu0 %v1024
        %1040 = vmatpush.bf16.msra.mxu0 %v1023
        %1041 = vmatpush.bf16.msra.mxu0 %v1022
        %1042 = vmatpush.bf16.msra.mxu0 %v1021
        %1043 = vmatpush.bf16.msra.mxu0 %v1020
        %1044 = vmatmul.bf16.gmra.mxu0 %v946
        %v1045 = vpop.f32.mrf.mxu0
        %v1046 = vadd.f32 0.0, %v1045
        %v1047 = vpop.f32.mrf.mxu0
        %v1048 = vadd.f32 0.0, %v1047
        %1049 = vmatmul.bf16.gmra.mxu0 %v955
        %v1050 = vpop.f32.mrf.mxu0
        %v1051 = vadd.f32 0.0, %v1050
        %v1052 = vpop.f32.mrf.mxu0
        %v1053 = vadd.f32 0.0, %v1052
        %1054 = vmatmul.bf16.gmra.mxu0 %v964
        %v1055 = vpop.f32.mrf.mxu0
        %v1056 = vadd.f32 0.0, %v1055
        %v1057 = vpop.f32.mrf.mxu0
        %v1058 = vadd.f32 0.0, %v1057
        %1059 = vmatmul.bf16.gmra.mxu0 %v973
        %v1060 = vpop.f32.mrf.mxu0
        %v1061 = vadd.f32 0.0, %v1060
        %v1062 = vpop.f32.mrf.mxu0
        %v1063 = vadd.f32 0.0, %v1062
        %1064 = vmatmul.bf16.gmra.mxu0 %v982
        %v1065 = vpop.f32.mrf.mxu0
        %v1066 = vadd.f32 0.0, %v1065
        %v1067 = vpop.f32.mrf.mxu0
        %v1068 = vadd.f32 0.0, %v1067
        %1069 = vdwg.mxu0
        %v1070 = vadd.f32 %v898, %v1046
        %v1071 = vadd.f32 %v899, %v1048
        %v1072 = vadd.f32 %v900, %v1051
        %v1073 = vadd.f32 %v901, %v1053
        %v1074 = vadd.f32 %v902, %v1056
        %v1075 = vadd.f32 %v903, %v1058
        %v1076 = vadd.f32 %v904, %v1061
        %v1077 = vadd.f32 %v905, %v1063
        %v1078 = vadd.f32 %v906, %v1066
        %v1079 = vadd.f32 %v907, %v1068
        %v1080 = vld [vmem:[%s239 + $0x4] sm:$0xc]
        %s1081 = scalar_lea.vmem [#allocation3], 320
        %v1082 = vld [vmem:[%s1081] sm:$0xf]
        %v1083 = vld [vmem:[%s1081 + $0x4] sm:$0xf]
        %v1084 = vld [vmem:[%s1081 + $0x8] sm:$0xf]
        %v1085 = vld [vmem:[%s1081 + $0xc] sm:$0xf]
        %v1086 = vld [vmem:[%s1081 + $0x10] sm:$0xf]
        %v1087 = vld [vmem:[%s1081 + $0x14] sm:$0xf]
        %v1088 = vld [vmem:[%s1081 + $0x18] sm:$0xf]
        %v1089 = vld [vmem:[%s1081 + $0x1c] sm:$0xf]
        %v1090 = vld [vmem:[%s1081 + $0x20] sm:$0xf]
        %v1091 = vld [vmem:[%s1081 + $0x24] sm:$0xf]
        %v1092 = vld [vmem:[%s1081 + $0x28] sm:$0xf]
        %v1093 = vld [vmem:[%s1081 + $0x2c] sm:$0xf]
        %v1094 = vld [vmem:[%s1081 + $0x30] sm:$0xf]
        %v1095 = vld [vmem:[%s1081 + $0x34] sm:$0xf]
        %v1096 = vld [vmem:[%s1081 + $0x38] sm:$0xf]
        %v1097 = vld [vmem:[%s1081 + $0x3c] sm:$0xf]
        %v1099 = vunpack.c.l.b16 %v1080
        %v1100 = vpack.c.b16 %v784, %v1099
        %vm1101 = vcmask 1045504
        %v1102 = vrot.slane %v1100, 2
        %v1103 = vrot.slane %v795, 2
        %v1104 = vsel %vm1101, %v1102, %v1103
        %v1105 = vrot.slane %v796, 2
        %v1106 = vsel %vm1101, %v1103, %v1105
        %v1107 = vrot.slane %v797, 2
        %v1108 = vsel %vm1101, %v1105, %v1107
        %v1109 = vrot.slane %v798, 2
        %v1110 = vsel %vm1101, %v1107, %v1109
        %v1111 = vrot.slane %v928, 2
        %v1112 = vsel %vm1101, %v1109, %v1111
        %v1134 = vunpack.c.l.b16 %v1082
        %v1135 = vunpack.c.l.b16 %v1083
        %v1136 = vunpack.c.l.b16 %v1084
        %v1137 = vunpack.c.l.b16 %v1085
        %v1138 = vunpack.c.l.b16 %v1086
        %v1139 = vunpack.c.l.b16 %v1087
        %v1140 = vunpack.c.l.b16 %v1088
        %v1141 = vunpack.c.l.b16 %v1089
        %v1142 = vunpack.c.l.b16 %v1090
        %v1143 = vunpack.c.l.b16 %v1091
        %v1144 = vunpack.c.l.b16 %v1092
        %v1145 = vunpack.c.l.b16 %v1093
        %v1146 = vunpack.c.l.b16 %v1094
        %v1147 = vunpack.c.l.b16 %v1095
        %v1148 = vunpack.c.l.b16 %v1096
        %v1149 = vunpack.c.l.b16 %v1097
        %v1150 = vpack.c.b16 %v1135, %v1134
        %v1151 = vpack.c.b16 %v1137, %v1136
        %v1152 = vpack.c.b16 %v1139, %v1138
        %v1153 = vpack.c.b16 %v1141, %v1140
        %v1154 = vpack.c.b16 %v1143, %v1142
        %v1155 = vpack.c.b16 %v1145, %v1144
        %v1156 = vpack.c.b16 %v1147, %v1146
        %v1157 = vpack.c.b16 %v1149, %v1148
        %1166 = vmatpush.bf16.msra.mxu0 %v1157
        %1167 = vmatpush.bf16.msra.mxu0 %v1156
        %1168 = vmatpush.bf16.msra.mxu0 %v1155
        %1169 = vmatpush.bf16.msra.mxu0 %v1154
        %1170 = vmatpush.bf16.msra.mxu0 %v1153
        %1171 = vmatpush.bf16.msra.mxu0 %v1152
        %1172 = vmatpush.bf16.msra.mxu0 %v1151
        %1173 = vmatpush.bf16.msra.mxu0 %v1150
        %1174 = vmatmul.bf16.gmra.mxu0 %v1104
        %v1175 = vpop.f32.mrf.mxu0
        %v1176 = vadd.f32 0.0, %v1175
        %v1177 = vpop.f32.mrf.mxu0
        %v1178 = vadd.f32 0.0, %v1177
        %1179 = vmatmul.bf16.gmra.mxu0 %v1106
        %v1180 = vpop.f32.mrf.mxu0
        %v1181 = vadd.f32 0.0, %v1180
        %v1182 = vpop.f32.mrf.mxu0
        %v1183 = vadd.f32 0.0, %v1182
        %1184 = vmatmul.bf16.gmra.mxu0 %v1108
        %v1185 = vpop.f32.mrf.mxu0
        %v1186 = vadd.f32 0.0, %v1185
        %v1187 = vpop.f32.mrf.mxu0
        %v1188 = vadd.f32 0.0, %v1187
        %1189 = vmatmul.bf16.gmra.mxu0 %v1110
        %v1190 = vpop.f32.mrf.mxu0
        %v1191 = vadd.f32 0.0, %v1190
        %v1192 = vpop.f32.mrf.mxu0
        %v1193 = vadd.f32 0.0, %v1192
        %1194 = vmatmul.bf16.gmra.mxu0 %v1112
        %v1195 = vpop.f32.mrf.mxu0
        %v1196 = vadd.f32 0.0, %v1195
        %v1197 = vpop.f32.mrf.mxu0
        %v1198 = vadd.f32 0.0, %v1197
        %1199 = vdwg.mxu0
        %v1200 = vadd.f32 %v1070, %v1176
        %v1201 = vadd.f32 %v1071, %v1178
        %v1202 = vadd.f32 %v1072, %v1181
        %v1203 = vadd.f32 %v1073, %v1183
        %v1204 = vadd.f32 %v1074, %v1186
        %v1205 = vadd.f32 %v1075, %v1188
        %v1206 = vadd.f32 %v1076, %v1191
        %v1207 = vadd.f32 %v1077, %v1193
        %v1208 = vadd.f32 %v1078, %v1196
        %v1209 = vadd.f32 %v1079, %v1198
        %v1210 = vld [vmem:[%s239 + $0x8] sm:$0xc]
        %v1211 = vld [vmem:[%s239 + $0xc] sm:$0xf]
        %v1212 = vld [vmem:[%s239 + $0x10] sm:$0xf]
        %v1213 = vld [vmem:[%s239 + $0x14] sm:$0xf]
        %v1214 = vld [vmem:[%s239 + $0x18] sm:$0xf]
        %v1215 = vld [vmem:[%s239 + $0x1c] sm:$0xf]
        %v1216 = vld [vmem:[%s239 + $0x20] sm:$0xf]
        %v1217 = vld [vmem:[%s239 + $0x24] sm:$0xf]
        %v1218 = vld [vmem:[%s239 + $0x28] sm:$0xf]
        %v1219 = vld [vmem:[%s239 + $0x2c] sm:$0xf]
        %v1220 = vld [vmem:[%s239 + $0x30] sm:$0x3]
        %s1221 = scalar_lea.vmem [#allocation3], 384
        %v1222 = vld [vmem:[%s1221] sm:$0xf]
        %v1223 = vld [vmem:[%s1221 + $0x4] sm:$0xf]
        %v1224 = vld [vmem:[%s1221 + $0x8] sm:$0xf]
        %v1225 = vld [vmem:[%s1221 + $0xc] sm:$0xf]
        %v1226 = vld [vmem:[%s1221 + $0x10] sm:$0xf]
        %v1227 = vld [vmem:[%s1221 + $0x14] sm:$0xf]
        %v1228 = vld [vmem:[%s1221 + $0x18] sm:$0xf]
        %v1229 = vld [vmem:[%s1221 + $0x1c] sm:$0xf]
        %v1230 = vld [vmem:[%s1221 + $0x20] sm:$0xf]
        %v1231 = vld [vmem:[%s1221 + $0x24] sm:$0xf]
        %v1232 = vld [vmem:[%s1221 + $0x28] sm:$0xf]
        %v1233 = vld [vmem:[%s1221 + $0x2c] sm:$0xf]
        %v1234 = vld [vmem:[%s1221 + $0x30] sm:$0xf]
        %v1235 = vld [vmem:[%s1221 + $0x34] sm:$0xf]
        %v1236 = vld [vmem:[%s1221 + $0x38] sm:$0xf]
        %v1237 = vld [vmem:[%s1221 + $0x3c] sm:$0xf]
        %v1249 = vunpack.c.l.b16 %v1210
        %v1250 = vunpack.c.l.b16 %v1211
        %v1251 = vunpack.c.l.b16 %v1212
        %v1252 = vunpack.c.l.b16 %v1213
        %v1253 = vunpack.c.l.b16 %v1214
        %v1254 = vunpack.c.l.b16 %v1215
        %v1255 = vunpack.c.l.b16 %v1216
        %v1256 = vunpack.c.l.b16 %v1217
        %v1257 = vunpack.c.l.b16 %v1218
        %v1258 = vunpack.c.l.b16 %v1219
        %v1259 = vunpack.c.l.b16 %v1220
        %v1260 = vpack.c.b16 %v1250, %v1249
        %v1261 = vpack.c.b16 %v1252, %v1251
        %v1262 = vpack.c.b16 %v1254, %v1253
        %v1263 = vpack.c.b16 %v1256, %v1255
        %v1264 = vpack.c.b16 %v1258, %v1257
        %v1265 = vpack.c.b16 %v1259, %v1259
        %v1266 = vrot.slane %v1260, 2
        %v1267 = vrot.slane %v1261, 2
        %v1268 = vsel %vm1101, %v1266, %v1267
        %v1269 = vrot.slane %v1262, 2
        %v1270 = vsel %vm1101, %v1267, %v1269
        %v1271 = vrot.slane %v1263, 2
        %v1272 = vsel %vm1101, %v1269, %v1271
        %v1273 = vrot.slane %v1264, 2
        %v1274 = vsel %vm1101, %v1271, %v1273
        %v1275 = vrot.slane %v1265, 2
        %v1276 = vsel %vm1101, %v1273, %v1275
        %v1298 = vunpack.c.l.b16 %v1222
        %v1299 = vunpack.c.l.b16 %v1223
        %v1300 = vunpack.c.l.b16 %v1224
        %v1301 = vunpack.c.l.b16 %v1225
        %v1302 = vunpack.c.l.b16 %v1226
        %v1303 = vunpack.c.l.b16 %v1227
        %v1304 = vunpack.c.l.b16 %v1228
        %v1305 = vunpack.c.l.b16 %v1229
        %v1306 = vunpack.c.l.b16 %v1230
        %v1307 = vunpack.c.l.b16 %v1231
        %v1308 = vunpack.c.l.b16 %v1232
        %v1309 = vunpack.c.l.b16 %v1233
        %v1310 = vunpack.c.l.b16 %v1234
        %v1311 = vunpack.c.l.b16 %v1235
        %v1312 = vunpack.c.l.b16 %v1236
        %v1313 = vunpack.c.l.b16 %v1237
        %v1314 = vpack.c.b16 %v1299, %v1298
        %v1315 = vpack.c.b16 %v1301, %v1300
        %v1316 = vpack.c.b16 %v1303, %v1302
        %v1317 = vpack.c.b16 %v1305, %v1304
        %v1318 = vpack.c.b16 %v1307, %v1306
        %v1319 = vpack.c.b16 %v1309, %v1308
        %v1320 = vpack.c.b16 %v1311, %v1310
        %v1321 = vpack.c.b16 %v1313, %v1312
        %1330 = vmatpush.bf16.msra.mxu0 %v1321
        %1331 = vmatpush.bf16.msra.mxu0 %v1320
        %1332 = vmatpush.bf16.msra.mxu0 %v1319
        %1333 = vmatpush.bf16.msra.mxu0 %v1318
        %1334 = vmatpush.bf16.msra.mxu0 %v1317
        %1335 = vmatpush.bf16.msra.mxu0 %v1316
        %1336 = vmatpush.bf16.msra.mxu0 %v1315
        %1337 = vmatpush.bf16.msra.mxu0 %v1314
        %1338 = vmatmul.bf16.gmra.mxu0 %v1268
        %v1339 = vpop.f32.mrf.mxu0
        %v1340 = vadd.f32 0.0, %v1339
        %v1341 = vpop.f32.mrf.mxu0
        %v1342 = vadd.f32 0.0, %v1341
        %1343 = vmatmul.bf16.gmra.mxu0 %v1270
        %v1344 = vpop.f32.mrf.mxu0
        %v1345 = vadd.f32 0.0, %v1344
        %v1346 = vpop.f32.mrf.mxu0
        %v1347 = vadd.f32 0.0, %v1346
        %1348 = vmatmul.bf16.gmra.mxu0 %v1272
        %v1349 = vpop.f32.mrf.mxu0
        %v1350 = vadd.f32 0.0, %v1349
        %v1351 = vpop.f32.mrf.mxu0
        %v1352 = vadd.f32 0.0, %v1351
        %1353 = vmatmul.bf16.gmra.mxu0 %v1274
        %v1354 = vpop.f32.mrf.mxu0
        %v1355 = vadd.f32 0.0, %v1354
        %v1356 = vpop.f32.mrf.mxu0
        %v1357 = vadd.f32 0.0, %v1356
        %1358 = vmatmul.bf16.gmra.mxu0 %v1276
        %v1359 = vpop.f32.mrf.mxu0
        %v1360 = vadd.f32 0.0, %v1359
        %v1361 = vpop.f32.mrf.mxu0
        %v1362 = vadd.f32 0.0, %v1361
        %1363 = vdwg.mxu0
        %v1364 = vadd.f32 %v1200, %v1340
        %v1365 = vadd.f32 %v1201, %v1342
        %v1366 = vadd.f32 %v1202, %v1345
        %v1367 = vadd.f32 %v1203, %v1347
        %v1368 = vadd.f32 %v1204, %v1350
        %v1369 = vadd.f32 %v1205, %v1352
        %v1370 = vadd.f32 %v1206, %v1355
        %v1371 = vadd.f32 %v1207, %v1357
        %v1372 = vadd.f32 %v1208, %v1360
        %v1373 = vadd.f32 %v1209, %v1362
        %v1374 = vld [vmem:[%s239 + $0x30] sm:$0x7]
        %s1375 = scalar_lea.vmem [#allocation3], 448
        %v1376 = vld [vmem:[%s1375] sm:$0xf]
        %v1377 = vld [vmem:[%s1375 + $0x4] sm:$0xf]
        %v1378 = vld [vmem:[%s1375 + $0x8] sm:$0xf]
        %v1379 = vld [vmem:[%s1375 + $0xc] sm:$0xf]
        %v1380 = vld [vmem:[%s1375 + $0x10] sm:$0xf]
        %v1381 = vld [vmem:[%s1375 + $0x14] sm:$0xf]
        %v1382 = vld [vmem:[%s1375 + $0x18] sm:$0xf]
        %v1383 = vld [vmem:[%s1375 + $0x1c] sm:$0xf]
        %v1384 = vld [vmem:[%s1375 + $0x20] sm:$0xf]
        %v1385 = vld [vmem:[%s1375 + $0x24] sm:$0xf]
        %v1386 = vld [vmem:[%s1375 + $0x28] sm:$0xf]
        %v1387 = vld [vmem:[%s1375 + $0x2c] sm:$0xf]
        %v1388 = vld [vmem:[%s1375 + $0x30] sm:$0xf]
        %v1389 = vld [vmem:[%s1375 + $0x34] sm:$0xf]
        %v1390 = vld [vmem:[%s1375 + $0x38] sm:$0xf]
        %v1391 = vld [vmem:[%s1375 + $0x3c] sm:$0xf]
        %v1393 = vunpack.c.l.b16 %v1374
        %v1394 = vpack.c.b16 %v1393, %v1393
        %vm1395 = vsmask.f32 5376
        %v1397 = vshrl.u32 %v1260, 16
        %v1399 = vrot.slane %v1397, 2
        %v1400 = vshll.u32 %v1260, 16
        %v1402 = vrot.slane %v1400, 3
        %v1403 = vor.u32 %v1399, %v1402
        %v1405 = vshrl.u32 %v1261, 16
        %v1407 = vrot.slane %v1405, 2
        %v1408 = vshll.u32 %v1261, 16
        %v1410 = vrot.slane %v1408, 3
        %v1411 = vor.u32 %v1407, %v1410
        %v1412 = vsel %vm1395, %v1403, %v1411
        %v1414 = vshrl.u32 %v1262, 16
        %v1416 = vrot.slane %v1414, 2
        %v1417 = vshll.u32 %v1262, 16
        %v1419 = vrot.slane %v1417, 3
        %v1420 = vor.u32 %v1416, %v1419
        %v1421 = vsel %vm1395, %v1411, %v1420
        %v1423 = vshrl.u32 %v1263, 16
        %v1425 = vrot.slane %v1423, 2
        %v1426 = vshll.u32 %v1263, 16
        %v1428 = vrot.slane %v1426, 3
        %v1429 = vor.u32 %v1425, %v1428
        %v1430 = vsel %vm1395, %v1420, %v1429
        %v1432 = vshrl.u32 %v1264, 16
        %v1434 = vrot.slane %v1432, 2
        %v1435 = vshll.u32 %v1264, 16
        %v1437 = vrot.slane %v1435, 3
        %v1438 = vor.u32 %v1434, %v1437
        %v1439 = vsel %vm1395, %v1429, %v1438
        %v1441 = vshrl.u32 %v1394, 16
        %v1443 = vrot.slane %v1441, 2
        %v1444 = vshll.u32 %v1394, 16
        %v1446 = vrot.slane %v1444, 3
        %v1447 = vor.u32 %v1443, %v1446
        %v1448 = vsel %vm1395, %v1438, %v1447
        %v1470 = vunpack.c.l.b16 %v1376
        %v1471 = vunpack.c.l.b16 %v1377
        %v1472 = vunpack.c.l.b16 %v1378
        %v1473 = vunpack.c.l.b16 %v1379
        %v1474 = vunpack.c.l.b16 %v1380
        %v1475 = vunpack.c.l.b16 %v1381
        %v1476 = vunpack.c.l.b16 %v1382
        %v1477 = vunpack.c.l.b16 %v1383
        %v1478 = vunpack.c.l.b16 %v1384
        %v1479 = vunpack.c.l.b16 %v1385
        %v1480 = vunpack.c.l.b16 %v1386
        %v1481 = vunpack.c.l.b16 %v1387
        %v1482 = vunpack.c.l.b16 %v1388
        %v1483 = vunpack.c.l.b16 %v1389
        %v1484 = vunpack.c.l.b16 %v1390
        %v1485 = vunpack.c.l.b16 %v1391
        %v1486 = vpack.c.b16 %v1471, %v1470
        %v1487 = vpack.c.b16 %v1473, %v1472
        %v1488 = vpack.c.b16 %v1475, %v1474
        %v1489 = vpack.c.b16 %v1477, %v1476
        %v1490 = vpack.c.b16 %v1479, %v1478
        %v1491 = vpack.c.b16 %v1481, %v1480
        %v1492 = vpack.c.b16 %v1483, %v1482
        %v1493 = vpack.c.b16 %v1485, %v1484
        %1502 = vmatpush.bf16.msra.mxu0 %v1493
        %1503 = vmatpush.bf16.msra.mxu0 %v1492
        %1504 = vmatpush.bf16.msra.mxu0 %v1491
        %1505 = vmatpush.bf16.msra.mxu0 %v1490
        %1506 = vmatpush.bf16.msra.mxu0 %v1489
        %1507 = vmatpush.bf16.msra.mxu0 %v1488
        %1508 = vmatpush.bf16.msra.mxu0 %v1487
        %1509 = vmatpush.bf16.msra.mxu0 %v1486
        %1510 = vmatmul.bf16.gmra.mxu0 %v1412
        %v1511 = vpop.f32.mrf.mxu0
        %v1512 = vadd.f32 0.0, %v1511
        %v1513 = vpop.f32.mrf.mxu0
        %v1514 = vadd.f32 0.0, %v1513
        %1515 = vmatmul.bf16.gmra.mxu0 %v1421
        %v1516 = vpop.f32.mrf.mxu0
        %v1517 = vadd.f32 0.0, %v1516
        %v1518 = vpop.f32.mrf.mxu0
        %v1519 = vadd.f32 0.0, %v1518
        %1520 = vmatmul.bf16.gmra.mxu0 %v1430
        %v1521 = vpop.f32.mrf.mxu0
        %v1522 = vadd.f32 0.0, %v1521
        %v1523 = vpop.f32.mrf.mxu0
        %v1524 = vadd.f32 0.0, %v1523
        %1525 = vmatmul.bf16.gmra.mxu0 %v1439
        %v1526 = vpop.f32.mrf.mxu0
        %v1527 = vadd.f32 0.0, %v1526
        %v1528 = vpop.f32.mrf.mxu0
        %v1529 = vadd.f32 0.0, %v1528
        %1530 = vmatmul.bf16.gmra.mxu0 %v1448
        %v1531 = vpop.f32.mrf.mxu0
        %v1532 = vadd.f32 0.0, %v1531
        %v1533 = vpop.f32.mrf.mxu0
        %v1534 = vadd.f32 0.0, %v1533
        %1535 = vdwg.mxu0
        %v1536 = vadd.f32 %v1364, %v1512
        %v1537 = vadd.f32 %v1365, %v1514
        %v1538 = vadd.f32 %v1366, %v1517
        %v1539 = vadd.f32 %v1367, %v1519
        %v1540 = vadd.f32 %v1368, %v1522
        %v1541 = vadd.f32 %v1369, %v1524
        %v1542 = vadd.f32 %v1370, %v1527
        %v1543 = vadd.f32 %v1371, %v1529
        %v1544 = vadd.f32 %v1372, %v1532
        %v1545 = vadd.f32 %v1373, %v1534
        %v1546 = vld [vmem:[%s239 + $0x8] sm:$0x8]
        %s1547 = scalar_lea.vmem [#allocation3], 512
        %v1548 = vld [vmem:[%s1547] sm:$0xf]
        %v1549 = vld [vmem:[%s1547 + $0x4] sm:$0xf]
        %v1550 = vld [vmem:[%s1547 + $0x8] sm:$0xf]
        %v1551 = vld [vmem:[%s1547 + $0xc] sm:$0xf]
        %v1552 = vld [vmem:[%s1547 + $0x10] sm:$0xf]
        %v1553 = vld [vmem:[%s1547 + $0x14] sm:$0xf]
        %v1554 = vld [vmem:[%s1547 + $0x18] sm:$0xf]
        %v1555 = vld [vmem:[%s1547 + $0x1c] sm:$0xf]
        %v1556 = vld [vmem:[%s1547 + $0x20] sm:$0xf]
        %v1557 = vld [vmem:[%s1547 + $0x24] sm:$0xf]
        %v1558 = vld [vmem:[%s1547 + $0x28] sm:$0xf]
        %v1559 = vld [vmem:[%s1547 + $0x2c] sm:$0xf]
        %v1560 = vld [vmem:[%s1547 + $0x30] sm:$0xf]
        %v1561 = vld [vmem:[%s1547 + $0x34] sm:$0xf]
        %v1562 = vld [vmem:[%s1547 + $0x38] sm:$0xf]
        %v1563 = vld [vmem:[%s1547 + $0x3c] sm:$0xf]
        %v1565 = vunpack.c.l.b16 %v1546
        %v1566 = vpack.c.b16 %v1250, %v1565
        %vm1567 = vcmask 1044480
        %v1568 = vrot.slane %v1566, 3
        %v1569 = vrot.slane %v1261, 3
        %v1570 = vsel %vm1567, %v1568, %v1569
        %v1571 = vrot.slane %v1262, 3
        %v1572 = vsel %vm1567, %v1569, %v1571
        %v1573 = vrot.slane %v1263, 3
        %v1574 = vsel %vm1567, %v1571, %v1573
        %v1575 = vrot.slane %v1264, 3
        %v1576 = vsel %vm1567, %v1573, %v1575
        %v1577 = vrot.slane %v1394, 3
        %v1578 = vsel %vm1567, %v1575, %v1577
        %v1600 = vunpack.c.l.b16 %v1548
        %v1601 = vunpack.c.l.b16 %v1549
        %v1602 = vunpack.c.l.b16 %v1550
        %v1603 = vunpack.c.l.b16 %v1551
        %v1604 = vunpack.c.l.b16 %v1552
        %v1605 = vunpack.c.l.b16 %v1553
        %v1606 = vunpack.c.l.b16 %v1554
        %v1607 = vunpack.c.l.b16 %v1555
        %v1608 = vunpack.c.l.b16 %v1556
        %v1609 = vunpack.c.l.b16 %v1557
        %v1610 = vunpack.c.l.b16 %v1558
        %v1611 = vunpack.c.l.b16 %v1559
        %v1612 = vunpack.c.l.b16 %v1560
        %v1613 = vunpack.c.l.b16 %v1561
        %v1614 = vunpack.c.l.b16 %v1562
        %v1615 = vunpack.c.l.b16 %v1563
        %v1616 = vpack.c.b16 %v1601, %v1600
        %v1617 = vpack.c.b16 %v1603, %v1602
        %v1618 = vpack.c.b16 %v1605, %v1604
        %v1619 = vpack.c.b16 %v1607, %v1606
        %v1620 = vpack.c.b16 %v1609, %v1608
        %v1621 = vpack.c.b16 %v1611, %v1610
        %v1622 = vpack.c.b16 %v1613, %v1612
        %v1623 = vpack.c.b16 %v1615, %v1614
        %1632 = vmatpush.bf16.msra.mxu0 %v1623
        %1633 = vmatpush.bf16.msra.mxu0 %v1622
        %1634 = vmatpush.bf16.msra.mxu0 %v1621
        %1635 = vmatpush.bf16.msra.mxu0 %v1620
        %1636 = vmatpush.bf16.msra.mxu0 %v1619
        %1637 = vmatpush.bf16.msra.mxu0 %v1618
        %1638 = vmatpush.bf16.msra.mxu0 %v1617
        %1639 = vmatpush.bf16.msra.mxu0 %v1616
        %1640 = vmatmul.bf16.gmra.mxu0 %v1570
        %v1641 = vpop.f32.mrf.mxu0
        %v1642 = vadd.f32 0.0, %v1641
        %v1643 = vpop.f32.mrf.mxu0
        %v1644 = vadd.f32 0.0, %v1643
        %1645 = vmatmul.bf16.gmra.mxu0 %v1572
        %v1646 = vpop.f32.mrf.mxu0
        %v1647 = vadd.f32 0.0, %v1646
        %v1648 = vpop.f32.mrf.mxu0
        %v1649 = vadd.f32 0.0, %v1648
        %1650 = vmatmul.bf16.gmra.mxu0 %v1574
        %v1651 = vpop.f32.mrf.mxu0
        %v1652 = vadd.f32 0.0, %v1651
        %v1653 = vpop.f32.mrf.mxu0
        %v1654 = vadd.f32 0.0, %v1653
        %1655 = vmatmul.bf16.gmra.mxu0 %v1576
        %v1656 = vpop.f32.mrf.mxu0
        %v1657 = vadd.f32 0.0, %v1656
        %v1658 = vpop.f32.mrf.mxu0
        %v1659 = vadd.f32 0.0, %v1658
        %1660 = vmatmul.bf16.gmra.mxu0 %v1578
        %v1661 = vpop.f32.mrf.mxu0
        %v1662 = vadd.f32 0.0, %v1661
        %v1663 = vpop.f32.mrf.mxu0
        %v1664 = vadd.f32 0.0, %v1663
        %1665 = vdwg.mxu0
        %v1666 = vadd.f32 %v1536, %v1642
        %v1667 = vadd.f32 %v1537, %v1644
        %v1668 = vadd.f32 %v1538, %v1647
        %v1669 = vadd.f32 %v1539, %v1649
        %v1670 = vadd.f32 %v1540, %v1652
        %v1671 = vadd.f32 %v1541, %v1654
        %v1672 = vadd.f32 %v1542, %v1657
        %v1673 = vadd.f32 %v1543, %v1659
        %v1674 = vadd.f32 %v1544, %v1662
        %v1675 = vadd.f32 %v1545, %v1664
        %1676 = vst [vmem:[#allocation2] sm:$0xff] %v1666
        %1677 = vst [vmem:[#allocation2 + $0x8] sm:$0xff] %v1667
        %1678 = vst [vmem:[#allocation2 + $0x10] sm:$0xff] %v1668
        %1679 = vst [vmem:[#allocation2 + $0x18] sm:$0xff] %v1669
        %1680 = vst [vmem:[#allocation2 + $0x20] sm:$0xff] %v1670
        %1681 = vst [vmem:[#allocation2 + $0x28] sm:$0xff] %v1671
        %1682 = vst [vmem:[#allocation2 + $0x30] sm:$0xff] %v1672
        %1683 = vst [vmem:[#allocation2 + $0x38] sm:$0xff] %v1673
        %1684 = vst [vmem:[#allocation2 + $0x40] sm:$0xff] %v1674
        %1685 = vst [vmem:[#allocation2 + $0x48] sm:$0xff] %v1675
        // Predicated region
        $region41: #{tpu_custom_call.1} parent=31 // pred_check
          %p1686 = pneg %p244
        $region42: #{tpu_custom_call.1} parent=31 // pred_check_branch
          %1688 = sbr.rel (%p1686) target = $region44
        $region43: #{tpu_custom_call.1} parent=31 // pred_region
          %v1689 = vld [vmem:[%s243] sm:$0x1]
          %v1691 = vperm.slane %v1689, 0
          %v1693 = vadd.f32 %v1666, %v1691
          %v1694 = vadd.f32 %v1667, %v1691
          %v1695 = vadd.f32 %v1668, %v1691
          %v1696 = vadd.f32 %v1669, %v1691
          %v1697 = vadd.f32 %v1670, %v1691
          %v1698 = vadd.f32 %v1671, %v1691
          %v1699 = vadd.f32 %v1672, %v1691
          %v1700 = vadd.f32 %v1673, %v1691
          %v1701 = vadd.f32 %v1674, %v1691
          %v1702 = vadd.f32 %v1675, %v1691
          %v1703 = vmax.f32 %v1693, 0.0
          %v1704 = vmax.f32 %v1694, 0.0
          %v1705 = vmax.f32 %v1695, 0.0
          %v1706 = vmax.f32 %v1696, 0.0
          %v1707 = vmax.f32 %v1697, 0.0
          %v1708 = vmax.f32 %v1698, 0.0
          %v1709 = vmax.f32 %v1699, 0.0
          %v1710 = vmax.f32 %v1700, 0.0
          %v1711 = vmax.f32 %v1701, 0.0
          %v1712 = vmax.f32 %v1702, 0.0
          %v1713 = vpack.c.bf16 %v1703, %v1703
          %v1714 = vpack.c.bf16 %v1704, %v1704
          %v1715 = vpack.c.bf16 %v1705, %v1705
          %v1716 = vpack.c.bf16 %v1706, %v1706
          %v1717 = vpack.c.bf16 %v1707, %v1707
          %v1718 = vpack.c.bf16 %v1708, %v1708
          %v1719 = vpack.c.bf16 %v1709, %v1709
          %v1720 = vpack.c.bf16 %v1710, %v1710
          %v1721 = vpack.c.bf16 %v1711, %v1711
          %v1722 = vpack.c.bf16 %v1712, %v1712
          %1723 = vst [vmem:[%s231] sm:$0xf] %v1713
          %1724 = vst [vmem:[%s231 + $0x4] sm:$0xf] %v1714
          %1725 = vst [vmem:[%s231 + $0x8] sm:$0xf] %v1715
          %1726 = vst [vmem:[%s231 + $0xc] sm:$0xf] %v1716
          %1727 = vst [vmem:[%s231 + $0x10] sm:$0xf] %v1717
          %1728 = vst [vmem:[%s231 + $0x14] sm:$0xf] %v1718
          %1729 = vst [vmem:[%s231 + $0x18] sm:$0xf] %v1719
          %1730 = vst [vmem:[%s231 + $0x1c] sm:$0xf] %v1720
          %1731 = vst [vmem:[%s231 + $0x20] sm:$0xf] %v1721
          %1732 = vst [vmem:[%s231 + $0x24] sm:$0xf] %v1722
        $region44: #{tpu_custom_call.1} parent=31 // pred_fallthru
          _
        %s1733 = sand.u32 %s129, 1
        %s1734 = scalar_lea.sflag [#allocation5], %s1733
        %s1735 = sand.u32 %s129, 1
        %s1736 = smul.addr %s1735, 40
        %s1737 = scalar_lea.vmem [#allocation6], %s1736
        // Predicated region
        $region45: #{tpu_custom_call.1} parent=31 // pred_check
          %p1738 = pneg %p139
        $region46: #{tpu_custom_call.1} parent=31 // pred_check_branch
          %1740 = sbr.rel (%p1738) target = $region48
        $region47: #{tpu_custom_call.1} parent=31 // pred_region
          %1742 = vsyncadd %s1734, 0
          %s1743 = smul.addr %s23, 10
          %s1744 = sadd.s32 %s24, %s1743
          %s1745 = smul.addr %s1744, 4
          %s1746 = scalar_lea.hbm %s3, %s1745
          %s1747 = sshll.u32 %s1737, 4
          %s1748 = int_to_ptr.vmem [resolvable:$true] %s1747
          %s1749 = sshll.u32 %s1746, 4
          %s1750 = int_to_ptr.hbm [resolvable:$true] %s1749
          %1755 = dma.vmem_to_hbm [thread:$0]  %s1748, 640, %s1750, %s1734, 64, 64, 4
        $region48: #{tpu_custom_call.1} parent=31 // pred_fallthru
          _
      $region32: #{tpu_custom_call.1} parent=5 // pred_fallthru
        _
      %p1756 = scmp.le.s32.totalorder 2, %s13
      // Predicated region
      $region49: #{tpu_custom_call.1} parent=5 // pred_check
        %p1757 = pneg %p1756
      $region50: #{tpu_custom_call.1} parent=5 // pred_check_branch
        %1759 = sbr.rel (%p1757) target = $region52
      $region51: #{tpu_custom_call.1} parent=5 // pred_region
        %s1760 = ssub.s32 %s13, 2
        // Predicated region
        $region53: #{tpu_custom_call.1} parent=51 // pred_check
          %p1761 = pneg %p145
        $region54: #{tpu_custom_call.1} parent=51 // pred_check_branch
          %1763 = sbr.rel (%p1761) target = $region56
        $region55: #{tpu_custom_call.1} parent=51 // pred_region
          %s1764 = sand.u32 %s130, 1
          %s1765 = scalar_lea.sflag [#allocation5], %s1764
          %s1766 = sand.u32 %s130, 1
          %s1767 = smul.addr %s1766, 40
          %s1768 = scalar_lea.vmem [#allocation6], %s1767
          %1770 = dma.done %s1765, 640
        $region56: #{tpu_custom_call.1} parent=51 // pred_fallthru
          _
      $region52: #{tpu_custom_call.1} parent=5 // pred_fallthru
        _
    $region6: #{tpu_custom_call.1} parent=1 // loop_footer
      %s17 = sadd.s32 1, %s13
    $region7: #{tpu_custom_call.1} parent=1 // loop_footer_branch
      %12 = sbr.rel target = $region3
    $region8: #{tpu_custom_call.1} parent=1 // loop_exit
      _
    %1771 = vsyncpa [#allocation4], 1
    %s1772 = scalar_lea.sflag [#allocation4], 1
    %1773 = vsyncpa %s1772, 1
    %1774 = vsyncpa [#allocation5], 1
    %s1775 = scalar_lea.sflag [#allocation5], 1
    %1776 = vsyncpa %s1775, 1

</llo_original>
